<compile_context>
chip_gen: v5e
topology: v5e:2x2
jax: 0.10.0
libtpu: 0.0.40
codegen_flags: <defaults>
</compile_context>

<pallas_src>
import jax
import jax.numpy as jnp
from jax.experimental import pallas as pl
from jax.experimental.pallas import tpu as pltpu


def _sage_net_kernel(a_ref, xs_ref, xt_ref, xd_ref, wmax_ref, wmean_ref,
                     wself_ref, out_ref, sum_acc, max_acc):
    """Grid = (dst_tiles, src_tiles); src axis is the reduction axis."""
    k = pl.program_id(1)
    f = max_acc.shape[1]

    @pl.when(k == 0)
    def _init():
        sum_acc[...] = jnp.zeros_like(sum_acc)
        max_acc[...] = jnp.full_like(max_acc, -1e30)

    a = a_ref[...]                                          # [TD, TS]

    # ---- mean path: neighbor-sum AND degree in one MXU dot (ones column) --
    sum_acc[...] += jnp.dot(a, xs_ref[...], preferred_element_type=jnp.float32)

    # ---- max path: source-node axis in lanes (dense vregs, XLU lane-reduce)
    xt = xt_ref[...]                                        # [F, TS]
    masked = jnp.where(a[:, None, :] > 0.0, xt[None, :, :], jnp.float32(-1e30))
    max_acc[...] = jnp.maximum(max_acc[...], jnp.max(masked, axis=-1))

    # ---- finalize: mean divide, fused output dots, log_softmax ------------
    @pl.when(k == pl.num_programs(1) - 1)
    def _finalize():
        s = sum_acc[...]                                    # [TD, F+1]
        deg = s[:, f:f + 1]                                 # [TD, 1]
        inv = pl.reciprocal(jnp.maximum(deg, 1.0), approx=True)   # EUP slot
        agg_mean = s[:, :f] * inv
        agg_max = jnp.where(deg > 0.0, max_acc[...], 0.0)   # isolated -> 0

        out = (jnp.dot(agg_max, wmax_ref[...], preferred_element_type=jnp.float32)
               + jnp.dot(agg_mean, wmean_ref[...], preferred_element_type=jnp.float32)
               + jnp.dot(xd_ref[...], wself_ref[...], preferred_element_type=jnp.float32))

        m = jnp.max(out, axis=1, keepdims=True)
        z = out - m
        lse = jnp.log(jnp.sum(jnp.exp(z), axis=1, keepdims=True))
        out_ref[...] = z - lse


def sage_net_forward(x, adj, params, *, tile=128):
    """x: [N, F] f32; adj: [N, N] f32, adj[i, j] = multiplicity of edge j -> i."""
    n, f = x.shape
    c = params["wl_max"].shape[1]
    n_pad = max(tile, ((n + tile - 1) // tile) * tile)

    # Zero-pad to tile multiples (padded src nodes have adj == 0 so they never
    # contribute; padded dst rows are sliced off below).
    x_pad = jnp.zeros((n_pad, f), jnp.float32).at[:n].set(x)
    adj_pad = jnp.zeros((n_pad, n_pad), jnp.float32).at[:n, :n].set(adj)

    # [x | 1]: folds degree into the mean matmul and bias into the output dot.
    x_aug = jnp.concatenate([x_pad, jnp.ones((n_pad, 1), jnp.float32)], axis=1)
    x_t = x_pad.T                                           # [F, N_pad] for lane-dense max

    w_max = params["wl_max"]                                # [F, C]
    w_mean = params["wl_mean"]                              # [F, C]
    w_self = jnp.concatenate([params["wr_max"] + params["wr_mean"],
                              params["b_max"] + params["b_mean"]], axis=0)  # [F+1, C]

    nt = n_pad // tile
    out = pl.pallas_call(
        _sage_net_kernel,
        out_shape=jax.ShapeDtypeStruct((n_pad, c), jnp.float32),
        grid_spec=pltpu.PrefetchScalarGridSpec(
            num_scalar_prefetch=0,
            grid=(nt, nt),
            in_specs=[
                pl.BlockSpec((tile, tile), lambda i, k: (i, k)),    # adjacency tile
                pl.BlockSpec((tile, f + 1), lambda i, k: (k, 0)),   # [x|1] src rows
                pl.BlockSpec((f, tile), lambda i, k: (0, k)),       # x^T src cols
                pl.BlockSpec((tile, f + 1), lambda i, k: (i, 0)),   # [x|1] dst rows
                pl.BlockSpec((f, c), lambda i, k: (0, 0)),          # Wl_max
                pl.BlockSpec((f, c), lambda i, k: (0, 0)),          # Wl_mean
                pl.BlockSpec((f + 1, c), lambda i, k: (0, 0)),      # [Wr_sum ; b_sum]
            ],
            out_specs=pl.BlockSpec((tile, c), lambda i, k: (i, 0)),
            scratch_shapes=[
                pltpu.VMEM((tile, f + 1), jnp.float32),   # running [sum | deg]
                pltpu.VMEM((tile, f), jnp.float32),       # running max
            ],
        ),
        compiler_params=pltpu.CompilerParams(
            dimension_semantics=("parallel", "arbitrary"),
            vmem_limit_bytes=32 * 1024 * 1024),
    )(adj_pad, x_aug, x_t, x_aug, w_max, w_mean, w_self)
    return out[:n]


def sage_net_reference(x, adj, params):
    """Pure-JAX reference for correctness checking."""
    deg = jnp.sum(adj, axis=1, keepdims=True)
    agg_mean = (adj @ x) / jnp.maximum(deg, 1.0)
    masked = jnp.where(adj[:, :, None] > 0.0, x[None, :, :], jnp.float32(-1e30))
    agg_max = jnp.where(deg > 0.0, jnp.max(masked, axis=1), 0.0)
    out = (agg_max @ params["wl_max"] + params["b_max"] + x @ params["wr_max"]
           + agg_mean @ params["wl_mean"] + params["b_mean"] + x @ params["wr_mean"])
    return jax.nn.log_softmax(out, axis=1)


def make_params(key, num_features, num_classes):
    ks = jax.random.split(key, 6)
    s = 0.1
    return {
        "wl_max":  s * jax.random.normal(ks[0], (num_features, num_classes), jnp.float32),
        "wr_max":  s * jax.random.normal(ks[1], (num_features, num_classes), jnp.float32),
        "b_max":   s * jax.random.normal(ks[2], (1, num_classes), jnp.float32),
        "wl_mean": s * jax.random.normal(ks[3], (num_features, num_classes), jnp.float32),
        "wr_mean": s * jax.random.normal(ks[4], (num_features, num_classes), jnp.float32),
        "b_mean":  s * jax.random.normal(ks[5], (1, num_classes), jnp.float32),
    }


def edge_index_to_dense_adj(edge_index, num_nodes):
    """edge_index: [2, E] int32 (row 0 = src, row 1 = dst). adj[dst, src] += 1
    so duplicate edges keep their multiplicity (matches PyG mean aggregation)."""
    src, dst = edge_index[0], edge_index[1]
    adj = jnp.zeros((num_nodes, num_nodes), jnp.float32)
    return adj.at[dst, src].add(1.0)


if __name__ == "__main__":
    key = jax.random.PRNGKey(0)
    k_x, k_e, k_p = jax.random.split(key, 3)

    num_nodes = 256        # two 128-row dst tiles x two 128-col src tiles
    num_features = 8
    num_classes = 4
    num_rand_edges = 512

    # Node features.
    x = jax.random.normal(k_x, (num_nodes, num_features), jnp.float32)

    # Deterministic edge_index [2, E]: ring (every node has >=1 in-neighbor)
    # plus random extra edges (may contain duplicates -> multiplicities).
    ring_src = jnp.arange(num_nodes, dtype=jnp.int32)
    ring_dst = (ring_src + 1) % num_nodes
    rnd = jax.random.randint(k_e, (2, num_rand_edges), 0, num_nodes, jnp.int32)
    edge_index = jnp.concatenate([jnp.stack([ring_src, ring_dst]), rnd], axis=1)

    adj = edge_index_to_dense_adj(edge_index, num_nodes)
    params = make_params(k_p, num_features, num_classes)

    out = sage_net_forward(x, adj, params)
    out = jax.block_until_ready(out)

    assert out.shape == (num_nodes, num_classes)
    # Rows of log_softmax output must exponentiate-sum to 1.
    assert bool(jnp.allclose(jnp.exp(out).sum(axis=1), 1.0, atol=1e-3))
    # Match the pure-JAX reference of the PyTorch module (tolerance covers the
    # approx EUP reciprocal used for the mean divide).
    ref = sage_net_reference(x, adj, params)
    assert bool(jnp.allclose(out, ref, atol=1e-3)), "mismatch vs reference"
    print("KERNEL_OK")
</pallas_src>

<mosaic_0001>
module attributes {stable_mosaic.version = 11 : i64} {
  func.func @_sage_net_kernel(%arg0: i32, %arg1: i32, %arg2: memref<128x128xf32, #tpu.memory_space<vmem>>, %arg3: memref<128x9xf32, #tpu.memory_space<vmem>>, %arg4: memref<8x128xf32, #tpu.memory_space<vmem>>, %arg5: memref<128x9xf32, #tpu.memory_space<vmem>>, %arg6: memref<8x4xf32, #tpu.memory_space<vmem>>, %arg7: memref<8x4xf32, #tpu.memory_space<vmem>>, %arg8: memref<9x4xf32, #tpu.memory_space<vmem>>, %arg9: memref<128x4xf32, #tpu.memory_space<vmem>>, %arg10: memref<128x9xf32, #tpu.memory_space<vmem>>, %arg11: memref<128x8xf32, #tpu.memory_space<vmem>>) attributes {dimension_semantics = [#tpu.dimension_semantics<parallel>, #tpu.dimension_semantics<arbitrary>], iteration_bounds = array<i64: 2, 2>, scalar_prefetch = 0 : i64, scratch_operands = 2 : i64, tpu.core_type = #tpu.core_type<tc>, window_params = [{transform_indices = @transform_0, window_bounds = array<i64: 128, 128>}, {transform_indices = @transform_1, window_bounds = array<i64: 128, 9>}, {transform_indices = @transform_2, window_bounds = array<i64: 8, 128>}, {transform_indices = @transform_3, window_bounds = array<i64: 128, 9>}, {pipeline_mode = #tpu.pipeline_mode<synchronous>, transform_indices = @transform_4, window_bounds = array<i64: 8, 4>}, {pipeline_mode = #tpu.pipeline_mode<synchronous>, transform_indices = @transform_5, window_bounds = array<i64: 8, 4>}, {pipeline_mode = #tpu.pipeline_mode<synchronous>, transform_indices = @transform_6, window_bounds = array<i64: 9, 4>}, {transform_indices = @transform_7, window_bounds = array<i64: 128, 4>}]} {
    %c0_i32 = arith.constant 0 : i32
    %0 = arith.cmpi eq, %arg1, %c0_i32 : i32
    %1 = arith.extui %0 : i1 to i32
    %c0_i32_0 = arith.constant 0 : i32
    %2 = arith.cmpi ne, %1, %c0_i32_0 : i32
    scf.if %2 {
      %cst_18 = arith.constant 0.000000e+00 : f32
      %27 = vector.broadcast %cst_18 : f32 to vector<128x9xf32>
      %c0_19 = arith.constant 0 : index
      %c0_20 = arith.constant 0 : index
      %28 = vector.load %arg10[%c0_19, %c0_20] : memref<128x9xf32, #tpu.memory_space<vmem>>, vector<128x9xf32>
      tpu.vector_store %arg10[%c0_19, %c0_20], %27 {strides = array<i32>} : memref<128x9xf32, #tpu.memory_space<vmem>>, vector<128x9xf32>,
      %cst_21 = arith.constant -1.000000e+30 : f32
      %29 = vector.broadcast %cst_21 : f32 to vector<128x8xf32>
      %c0_22 = arith.constant 0 : index
      %c0_23 = arith.constant 0 : index
      %30 = vector.load %arg11[%c0_22, %c0_23] : memref<128x8xf32, #tpu.memory_space<vmem>>, vector<128x8xf32>
      tpu.vector_store %arg11[%c0_22, %c0_23], %29 {strides = array<i32>} : memref<128x8xf32, #tpu.memory_space<vmem>>, vector<128x8xf32>,
    } else {
    }
    %c0 = arith.constant 0 : index
    %c0_1 = arith.constant 0 : index
    %3 = vector.load %arg2[%c0, %c0_1] : memref<128x128xf32, #tpu.memory_space<vmem>>, vector<128x128xf32>
    %c0_2 = arith.constant 0 : index
    %c0_3 = arith.constant 0 : index
    %4 = vector.load %arg10[%c0_2, %c0_3] : memref<128x9xf32, #tpu.memory_space<vmem>>, vector<128x9xf32>
    %c0_4 = arith.constant 0 : index
    %c0_5 = arith.constant 0 : index
    %5 = vector.load %arg3[%c0_4, %c0_5] : memref<128x9xf32, #tpu.memory_space<vmem>>, vector<128x9xf32>
    %cst = arith.constant dense<0.000000e+00> : vector<128x9xf32>
    %6 = tpu.matmul %3, %5, %cst {dimension_numbers = #tpu.dot_dimension_numbers<[1], [0], [0], [1], [0, 0, 1, 1], [], []>} : vector<128x128xf32>, vector<128x9xf32>, vector<128x9xf32> -> vector<128x9xf32>
    %7 = arith.addf %4, %6 : vector<128x9xf32>
    %c0_6 = arith.constant 0 : index
    %c0_7 = arith.constant 0 : index
    %8 = vector.load %arg10[%c0_6, %c0_7] : memref<128x9xf32, #tpu.memory_space<vmem>>, vector<128x9xf32>
    tpu.vector_store %arg10[%c0_6, %c0_7], %7 {strides = array<i32>} : memref<128x9xf32, #tpu.memory_space<vmem>>, vector<128x9xf32>,
    %c0_8 = arith.constant 0 : index
    %c0_9 = arith.constant 0 : index
    %9 = vector.load %arg4[%c0_8, %c0_9] : memref<8x128xf32, #tpu.memory_space<vmem>>, vector<8x128xf32>
    %10 = vector.shape_cast %3 : vector<128x128xf32> to vector<128x1x128xf32>
    %cst_10 = arith.constant 0.000000e+00 : f32
    %11 = vector.broadcast %cst_10 : f32 to vector<128x1x128xf32>
    %12 = arith.cmpf ogt, %10, %11 : vector<128x1x128xf32>
    %13 = vector.shape_cast %9 : vector<8x128xf32> to vector<1x8x128xf32>
    %cst_11 = arith.constant -1.000000e+30 : f32
    %14 = vector.shape_cast %12 : vector<128x1x128xi1> to vector<128x1x128xi1>
    %15 = vector.broadcast %14 : vector<128x1x128xi1> to vector<128x8x128xi1>
    %16 = vector.shape_cast %13 : vector<1x8x128xf32> to vector<1x8x128xf32>
    %17 = vector.broadcast %16 : vector<1x8x128xf32> to vector<128x8x128xf32>
    %18 = vector.broadcast %cst_11 : f32 to vector<128x8x128xf32>
    %19 = arith.select %15, %17, %18 : vector<128x8x128xi1>, vector<128x8x128xf32>
    %c0_12 = arith.constant 0 : index
    %c0_13 = arith.constant 0 : index
    %20 = vector.load %arg11[%c0_12, %c0_13] : memref<128x8xf32, #tpu.memory_space<vmem>>, vector<128x8xf32>
    %cst_14 = arith.constant dense<0xFF800000> : vector<128x8xf32>
    %21 = vector.multi_reduction <maximumf>, %19, %cst_14 [2] : vector<128x8x128xf32> to vector<128x8xf32>
    %22 = arith.maximumf %20, %21 : vector<128x8xf32>
    %c0_15 = arith.constant 0 : index
    %c0_16 = arith.constant 0 : index
    %23 = vector.load %arg11[%c0_15, %c0_16] : memref<128x8xf32, #tpu.memory_space<vmem>>, vector<128x8xf32>
    tpu.vector_store %arg11[%c0_15, %c0_16], %22 {strides = array<i32>} : memref<128x8xf32, #tpu.memory_space<vmem>>, vector<128x8xf32>,
    %c1_i32 = arith.constant 1 : i32
    %24 = arith.cmpi eq, %arg1, %c1_i32 : i32
    %25 = arith.extui %24 : i1 to i32
    %c0_i32_17 = arith.constant 0 : i32
    %26 = arith.cmpi ne, %25, %c0_i32_17 : i32
    scf.if %26 {
      %c0_18 = arith.constant 0 : index
      %c0_19 = arith.constant 0 : index
      %27 = vector.load %arg10[%c0_18, %c0_19] : memref<128x9xf32, #tpu.memory_space<vmem>>, vector<128x9xf32>
      %28 = vector.extract_strided_slice %27 {offsets = [0, 8], sizes = [128, 1], strides = [1, 1]} : vector<128x9xf32> to vector<128x1xf32>
      %cst_20 = arith.constant 1.000000e+00 : f32
      %29 = vector.broadcast %cst_20 : f32 to vector<128x1xf32>
      %30 = arith.maximumf %28, %29 : vector<128x1xf32>
      %31 = tpu.reciprocal %30 {approx = true} : vector<128x1xf32> -> vector<128x1xf32>
      %32 = vector.extract_strided_slice %27 {offsets = [0, 0], sizes = [128, 8], strides = [1, 1]} : vector<128x9xf32> to vector<128x8xf32>
      %33 = vector.broadcast %31 : vector<128x1xf32> to vector<128x8xf32>
      %34 = arith.mulf %32, %33 : vector<128x8xf32>
      %cst_21 = arith.constant 0.000000e+00 : f32
      %35 = vector.broadcast %cst_21 : f32 to vector<128x1xf32>
      %36 = arith.cmpf ogt, %28, %35 : vector<128x1xf32>
      %c0_22 = arith.constant 0 : index
      %c0_23 = arith.constant 0 : index
      %37 = vector.load %arg11[%c0_22, %c0_23] : memref<128x8xf32, #tpu.memory_space<vmem>>, vector<128x8xf32>
      %cst_24 = arith.constant 0.000000e+00 : f32
      %38 = vector.shape_cast %36 : vector<128x1xi1> to vector<128x1xi1>
      %39 = vector.broadcast %38 : vector<128x1xi1> to vector<128x8xi1>
      %40 = vector.broadcast %cst_24 : f32 to vector<128x8xf32>
      %41 = arith.select %39, %37, %40 : vector<128x8xi1>, vector<128x8xf32>
      %c0_25 = arith.constant 0 : index
      %c0_26 = arith.constant 0 : index
      %42 = vector.load %arg6[%c0_25, %c0_26] : memref<8x4xf32, #tpu.memory_space<vmem>>, vector<8x4xf32>
      %cst_27 = arith.constant dense<0.000000e+00> : vector<128x4xf32>
      %43 = tpu.matmul %41, %42, %cst_27 {dimension_numbers = #tpu.dot_dimension_numbers<[1], [0], [0], [1], [0, 0, 1, 1], [], []>} : vector<128x8xf32>, vector<8x4xf32>, vector<128x4xf32> -> vector<128x4xf32>
      %c0_28 = arith.constant 0 : index
      %c0_29 = arith.constant 0 : index
      %44 = vector.load %arg7[%c0_28, %c0_29] : memref<8x4xf32, #tpu.memory_space<vmem>>, vector<8x4xf32>
      %cst_30 = arith.constant dense<0.000000e+00> : vector<128x4xf32>
      %45 = tpu.matmul %34, %44, %cst_30 {dimension_numbers = #tpu.dot_dimension_numbers<[1], [0], [0], [1], [0, 0, 1, 1], [], []>} : vector<128x8xf32>, vector<8x4xf32>, vector<128x4xf32> -> vector<128x4xf32>
      %46 = arith.addf %43, %45 : vector<128x4xf32>
      %c0_31 = arith.constant 0 : index
      %c0_32 = arith.constant 0 : index
      %47 = vector.load %arg5[%c0_31, %c0_32] : memref<128x9xf32, #tpu.memory_space<vmem>>, vector<128x9xf32>
      %c0_33 = arith.constant 0 : index
      %c0_34 = arith.constant 0 : index
      %48 = vector.load %arg8[%c0_33, %c0_34] : memref<9x4xf32, #tpu.memory_space<vmem>>, vector<9x4xf32>
      %cst_35 = arith.constant dense<0.000000e+00> : vector<128x4xf32>
      %49 = tpu.matmul %47, %48, %cst_35 {dimension_numbers = #tpu.dot_dimension_numbers<[1], [0], [0], [1], [0, 0, 1, 1], [], []>} : vector<128x9xf32>, vector<9x4xf32>, vector<128x4xf32> -> vector<128x4xf32>
      %50 = arith.addf %46, %49 : vector<128x4xf32>
      %cst_36 = arith.constant dense<0xFF800000> : vector<128xf32>
      %51 = vector.multi_reduction <maximumf>, %50, %cst_36 [1] : vector<128x4xf32> to vector<128xf32>
      %52 = vector.shape_cast %51 : vector<128xf32> to vector<128x1xf32>
      %53 = vector.broadcast %52 : vector<128x1xf32> to vector<128x4xf32>
      %54 = arith.subf %50, %53 : vector<128x4xf32>
      %55 = math.exp %54 : vector<128x4xf32>
      %cst_37 = arith.constant dense<0.000000e+00> : vector<128xf32>
      %56 = vector.multi_reduction <add>, %55, %cst_37 [1] : vector<128x4xf32> to vector<128xf32>
      %57 = vector.shape_cast %56 : vector<128xf32> to vector<128x1xf32>
      %58 = math.log %57 : vector<128x1xf32>
      %59 = vector.broadcast %58 : vector<128x1xf32> to vector<128x4xf32>
      %60 = arith.subf %54, %59 : vector<128x4xf32>
      %c0_38 = arith.constant 0 : index
      %c0_39 = arith.constant 0 : index
      %61 = vector.load %arg9[%c0_38, %c0_39] : memref<128x4xf32, #tpu.memory_space<vmem>>, vector<128x4xf32>
      tpu.vector_store %arg9[%c0_38, %c0_39], %60 {strides = array<i32>} : memref<128x4xf32, #tpu.memory_space<vmem>>, vector<128x4xf32>,
    } else {
    }
    return
  }
  func.func @transform_0(%arg0: i32, %arg1: i32) -> (i32, i32) {
    %c0_i32 = arith.constant 0 : i32
    return %arg0, %arg1 : i32, i32
  }
  func.func @transform_1(%arg0: i32, %arg1: i32) -> (i32, i32) {
    %c0_i32 = arith.constant 0 : i32
    %c0_i32_0 = arith.constant 0 : i32
    return %arg1, %c0_i32 : i32, i32
  }
  func.func @transform_2(%arg0: i32, %arg1: i32) -> (i32, i32) {
    %c0_i32 = arith.constant 0 : i32
    %c0_i32_0 = arith.constant 0 : i32
    return %c0_i32, %arg1 : i32, i32
  }
  func.func @transform_3(%arg0: i32, %arg1: i32) -> (i32, i32) {
    %c0_i32 = arith.constant 0 : i32
    %c0_i32_0 = arith.constant 0 : i32
    return %arg0, %c0_i32 : i32, i32
  }
  func.func @transform_4(%arg0: i32, %arg1: i32) -> (i32, i32) {
    %c0_i32 = arith.constant 0 : i32
    %c0_i32_0 = arith.constant 0 : i32
    %c0_i32_1 = arith.constant 0 : i32
    return %c0_i32, %c0_i32_0 : i32, i32
  }
  func.func @transform_5(%arg0: i32, %arg1: i32) -> (i32, i32) {
    %c0_i32 = arith.constant 0 : i32
    %c0_i32_0 = arith.constant 0 : i32
    %c0_i32_1 = arith.constant 0 : i32
    return %c0_i32, %c0_i32_0 : i32, i32
  }
  func.func @transform_6(%arg0: i32, %arg1: i32) -> (i32, i32) {
    %c0_i32 = arith.constant 0 : i32
    %c0_i32_0 = arith.constant 0 : i32
    %c0_i32_1 = arith.constant 0 : i32
    return %c0_i32, %c0_i32_0 : i32, i32
  }
  func.func @transform_7(%arg0: i32, %arg1: i32) -> (i32, i32) {
    %c0_i32 = arith.constant 0 : i32
    %c0_i32_0 = arith.constant 0 : i32
    return %arg0, %c0_i32 : i32, i32
  }
}

</mosaic_0001>

<llo_original>
// kernel: tpu_custom_call.1
$region0: #{tpu_custom_call.1}
  #allocation0 [shape = 'u32[]', space=smem, size = 0x4, offset = 0x4, fixed_abs, tag = 'smem constant byte address 0x4 - core index']
  #allocation1 [shape = 'u32[72,128]{1,0:T(1,128)}', space=vmem, size = 0x9000, scoped, tag = 'internal scratch']
  #allocation2 [shape = 'f32[128,9]{1,0:T(8,128)}', space=vmem, size = 0x10000, scoped, tag = 'scratch operand']
  #allocation3 [shape = 'f32[128,8]{1,0:T(8,128)}', space=vmem, size = 0x10000, scoped, tag = 'scratch operand']
  %s0 = inlined_call_operand.vmem [shape: f32[256,256], index: 0, kind: input, shape index: {}]
  %s1 = inlined_call_operand.vmem [shape: f32[256,9], index: 1, kind: input, shape index: {}]
  %s2 = inlined_call_operand.vmem [shape: f32[8,256], index: 2, kind: input, shape index: {}]
  %s3 = inlined_call_operand.vmem [shape: f32[256,9], index: 3, kind: input, shape index: {}]
  %s4 = inlined_call_operand.vmem [shape: f32[8,4], index: 4, kind: input, shape index: {}]
  %s5 = inlined_call_operand.vmem [shape: f32[8,4], index: 5, kind: input, shape index: {}]
  %s6 = inlined_call_operand.vmem [shape: f32[9,4], index: 6, kind: input, shape index: {}]
  %s7 = inlined_call_operand.vmem [shape: f32[256,4], index: 7, kind: output, shape index: {}]
  %s8 = sld [smem:[#allocation0]]
  $region107: #{tpu_custom_call.1} parent=0
    _
  %s10 = ssub.s32 1, %s8
  %s11 = scalar_select 0, %s10, %s8
  $region1: #{tpu_custom_call.1} parent=0
    #allocation4 [shape = 'u8[131072]{0}', space=vmem, size = 0x20000, scoped, tag = 'input window, operand 0']
    loop: start=0, step=1, limit=6
    $region2: #{tpu_custom_call.1} parent=1 // loop_pre_header
      _
    $region3: #{tpu_custom_call.1} parent=1 // loop_header
      %s13 = sphi 0, %s17
      %p14 = scmp.ge.s32.totalorder %s13, 6
      %s20 = sphi 0, %s32
      %s21 = sphi 0, %s28
      %s22 = sphi 0, %s20
      %s23 = sphi 0, %s21
      %s24 = sphi 0, %s22
      %s25 = sphi 0, %s23
      %s37 = sphi 0, %s39
      %s40 = sphi 0, %s37
      %s41 = sphi 0, %s40
      %s57 = sphi 0, %s41
      %s63 = sphi 0, %s65
      %s66 = sphi 0, %s63
      %s67 = sphi 0, %s66
      %s83 = sphi 0, %s67
      %s89 = sphi 0, %s91
      %s92 = sphi 0, %s89
      %s93 = sphi 0, %s92
      %s109 = sphi 0, %s93
      %s115 = sphi 0, %s117
      %s118 = sphi 0, %s115
      %s119 = sphi 0, %s118
      %s135 = sphi 0, %s119
      %s139 = sphi 0, %s139
      %s141 = sphi 0, %s139
      %s142 = sphi 0, %s141
      %s156 = sphi 0, %s142
      %s160 = sphi 0, %s160
      %s162 = sphi 0, %s160
      %s163 = sphi 0, %s162
      %s177 = sphi 0, %s163
      %s181 = sphi 0, %s181
      %s183 = sphi 0, %s181
      %s184 = sphi 0, %s183
      %s198 = sphi 0, %s184
      %s204 = sphi 0, %s206
      %s207 = sphi 0, %s204
      %s208 = sphi 0, %s207
      %s224 = sphi 0, %s208
    $region4: #{tpu_custom_call.1} parent=1 // loop_header_branch
      %16 = sbr.rel (%p14) target = $region8
    $region5: #{tpu_custom_call.1} parent=1 // loop_body
      %s18 = ssub.s32 %s13, 1
      %s19 = ssub.s32 %s13, 2
      %s26 = sadd.s32 1, %s21
      %p27 = scmp.ge.s32.totalorder %s26, 2
      %s28 = scalar_select %p27, 0, %s26
      %s29 = sadd.s32 1, %s20
      %s30 = scalar_select %p27, %s29, %s20
      %p31 = scmp.ge.s32.totalorder %s30, 2
      %s32 = scalar_select %p31, 0, %s30
      %s33 = ssub.s32 %s20, %s32
      %s34 = ssub.s32 %s21, %s28
      %s35 = sor.u32 %s33, %s34
      %p36 = scmp.eq.s32.totalorder %s35, 0
      %s38 = sadd.s32 %s37, 1
      %s39 = scalar_select %p36, %s37, %s38
      %p42 = pneg %p36
      %p43 = scmp.eq.s32.totalorder %s13, 3
      %p44 = por %p42, %p43
      %p45 = scmp.ne.s32.totalorder %s37, %s40
      %p46 = scmp.eq.s32.totalorder %s13, 0
      %p47 = por %p45, %p46
      %p48 = scmp.ne.s32.totalorder %s37, %s40
      %p49 = scmp.eq.s32.totalorder %s18, 3
      %p50 = por %p48, %p49
      %p51 = scmp.ne.s32.totalorder %s40, %s41
      %p52 = scmp.eq.s32.totalorder %s18, 0
      %p53 = por %p51, %p52
      %p54 = scmp.ne.s32.totalorder %s40, %s41
      %p55 = scmp.eq.s32.totalorder %s19, 3
      %p56 = por %p54, %p55
      %p58 = scmp.ne.s32.totalorder %s41, %s57
      %p59 = scmp.eq.s32.totalorder %s19, 0
      %p60 = por %p58, %p59
      %s61 = ssub.s32 %s21, %s28
      %p62 = scmp.eq.s32.totalorder %s61, 0
      %s64 = sadd.s32 %s63, 1
      %s65 = scalar_select %p62, %s63, %s64
      %p68 = pneg %p62
      %p69 = scmp.eq.s32.totalorder %s13, 3
      %p70 = por %p68, %p69
      %p71 = scmp.ne.s32.totalorder %s63, %s66
      %p72 = scmp.eq.s32.totalorder %s13, 0
      %p73 = por %p71, %p72
      %p74 = scmp.ne.s32.totalorder %s63, %s66
      %p75 = scmp.eq.s32.totalorder %s18, 3
      %p76 = por %p74, %p75
      %p77 = scmp.ne.s32.totalorder %s66, %s67
      %p78 = scmp.eq.s32.totalorder %s18, 0
      %p79 = por %p77, %p78
      %p80 = scmp.ne.s32.totalorder %s66, %s67
      %p81 = scmp.eq.s32.totalorder %s19, 3
      %p82 = por %p80, %p81
      %p84 = scmp.ne.s32.totalorder %s67, %s83
      %p85 = scmp.eq.s32.totalorder %s19, 0
      %p86 = por %p84, %p85
      %s87 = ssub.s32 %s21, %s28
      %p88 = scmp.eq.s32.totalorder %s87, 0
      %s90 = sadd.s32 %s89, 1
      %s91 = scalar_select %p88, %s89, %s90
      %p94 = pneg %p88
      %p95 = scmp.eq.s32.totalorder %s13, 3
      %p96 = por %p94, %p95
      %p97 = scmp.ne.s32.totalorder %s89, %s92
      %p98 = scmp.eq.s32.totalorder %s13, 0
      %p99 = por %p97, %p98
      %p100 = scmp.ne.s32.totalorder %s89, %s92
      %p101 = scmp.eq.s32.totalorder %s18, 3
      %p102 = por %p100, %p101
      %p103 = scmp.ne.s32.totalorder %s92, %s93
      %p104 = scmp.eq.s32.totalorder %s18, 0
      %p105 = por %p103, %p104
      %p106 = scmp.ne.s32.totalorder %s92, %s93
      %p107 = scmp.eq.s32.totalorder %s19, 3
      %p108 = por %p106, %p107
      %p110 = scmp.ne.s32.totalorder %s93, %s109
      %p111 = scmp.eq.s32.totalorder %s19, 0
      %p112 = por %p110, %p111
      %s113 = ssub.s32 %s20, %s32
      %p114 = scmp.eq.s32.totalorder %s113, 0
      %s116 = sadd.s32 %s115, 1
      %s117 = scalar_select %p114, %s115, %s116
      %p120 = pneg %p114
      %p121 = scmp.eq.s32.totalorder %s13, 3
      %p122 = por %p120, %p121
      %p123 = scmp.ne.s32.totalorder %s115, %s118
      %p124 = scmp.eq.s32.totalorder %s13, 0
      %p125 = por %p123, %p124
      %p126 = scmp.ne.s32.totalorder %s115, %s118
      %p127 = scmp.eq.s32.totalorder %s18, 3
      %p128 = por %p126, %p127
      %p129 = scmp.ne.s32.totalorder %s118, %s119
      %p130 = scmp.eq.s32.totalorder %s18, 0
      %p131 = por %p129, %p130
      %p132 = scmp.ne.s32.totalorder %s118, %s119
      %p133 = scmp.eq.s32.totalorder %s19, 3
      %p134 = por %p132, %p133
      %p136 = scmp.ne.s32.totalorder %s119, %s135
      %p137 = scmp.eq.s32.totalorder %s19, 0
      %p138 = por %p136, %p137
      %s140 = sadd.s32 %s139, 1
      %p143 = scmp.eq.s32.totalorder %s13, 3
      %p144 = scmp.ne.s32.totalorder %s139, %s141
      %p145 = scmp.eq.s32.totalorder %s13, 0
      %p146 = por %p144, %p145
      %p147 = scmp.ne.s32.totalorder %s139, %s141
      %p148 = scmp.eq.s32.totalorder %s18, 3
      %p149 = por %p147, %p148
      %p150 = scmp.ne.s32.totalorder %s141, %s142
      %p151 = scmp.eq.s32.totalorder %s18, 0
      %p152 = por %p150, %p151
      %p153 = scmp.ne.s32.totalorder %s141, %s142
      %p154 = scmp.eq.s32.totalorder %s19, 3
      %p155 = por %p153, %p154
      %p157 = scmp.ne.s32.totalorder %s142, %s156
      %p158 = scmp.eq.s32.totalorder %s19, 0
      %p159 = por %p157, %p158
      %s161 = sadd.s32 %s160, 1
      %p164 = scmp.eq.s32.totalorder %s13, 3
      %p165 = scmp.ne.s32.totalorder %s160, %s162
      %p166 = scmp.eq.s32.totalorder %s13, 0
      %p167 = por %p165, %p166
      %p168 = scmp.ne.s32.totalorder %s160, %s162
      %p169 = scmp.eq.s32.totalorder %s18, 3
      %p170 = por %p168, %p169
      %p171 = scmp.ne.s32.totalorder %s162, %s163
      %p172 = scmp.eq.s32.totalorder %s18, 0
      %p173 = por %p171, %p172
      %p174 = scmp.ne.s32.totalorder %s162, %s163
      %p175 = scmp.eq.s32.totalorder %s19, 3
      %p176 = por %p174, %p175
      %p178 = scmp.ne.s32.totalorder %s163, %s177
      %p179 = scmp.eq.s32.totalorder %s19, 0
      %p180 = por %p178, %p179
      %s182 = sadd.s32 %s181, 1
      %p185 = scmp.eq.s32.totalorder %s13, 3
      %p186 = scmp.ne.s32.totalorder %s181, %s183
      %p187 = scmp.eq.s32.totalorder %s13, 0
      %p188 = por %p186, %p187
      %p189 = scmp.ne.s32.totalorder %s181, %s183
      %p190 = scmp.eq.s32.totalorder %s18, 3
      %p191 = por %p189, %p190
      %p192 = scmp.ne.s32.totalorder %s183, %s184
      %p193 = scmp.eq.s32.totalorder %s18, 0
      %p194 = por %p192, %p193
      %p195 = scmp.ne.s32.totalorder %s183, %s184
      %p196 = scmp.eq.s32.totalorder %s19, 3
      %p197 = por %p195, %p196
      %p199 = scmp.ne.s32.totalorder %s184, %s198
      %p200 = scmp.eq.s32.totalorder %s19, 0
      %p201 = por %p199, %p200
      %s202 = ssub.s32 %s20, %s32
      %p203 = scmp.eq.s32.totalorder %s202, 0
      %s205 = sadd.s32 %s204, 1
      %s206 = scalar_select %p203, %s204, %s205
      %p209 = pneg %p203
      %p210 = scmp.eq.s32.totalorder %s13, 3
      %p211 = por %p209, %p210
      %p212 = scmp.ne.s32.totalorder %s204, %s207
      %p213 = scmp.eq.s32.totalorder %s13, 0
      %p214 = por %p212, %p213
      %p215 = scmp.ne.s32.totalorder %s204, %s207
      %p216 = scmp.eq.s32.totalorder %s18, 3
      %p217 = por %p215, %p216
      %p218 = scmp.ne.s32.totalorder %s207, %s208
      %p219 = scmp.eq.s32.totalorder %s18, 0
      %p220 = por %p218, %p219
      %p221 = scmp.ne.s32.totalorder %s207, %s208
      %p222 = scmp.eq.s32.totalorder %s19, 3
      %p223 = por %p221, %p222
      %p225 = scmp.ne.s32.totalorder %s208, %s224
      %p226 = scmp.eq.s32.totalorder %s19, 0
      %p227 = por %p225, %p226
      %p228 = scmp.le.s32.totalorder 1, %s13
      %p229 = scmp.lt.s32.totalorder %s13, 5
      %p230 = pnand %p228, %p229
      %p231 = pneg %p230
      // Predicated region
      $region9: #{tpu_custom_call.1} parent=5 // pred_check
        _
      $region10: #{tpu_custom_call.1} parent=5 // pred_check_branch
        %233 = sbr.rel (%p230) target = $region12
      $region11: #{tpu_custom_call.1} parent=5 // pred_region
        %s234 = ssub.s32 %s13, 1
        // Predicated region
        $region13: #{tpu_custom_call.1} parent=11 // pred_check
          %p235 = pneg %p152
        $region14: #{tpu_custom_call.1} parent=11 // pred_check_branch
          %237 = sbr.rel (%p235) target = $region16
        $region15: #{tpu_custom_call.1} parent=11 // pred_region
          _
        $region16: #{tpu_custom_call.1} parent=11 // pred_fallthru
          _
        // Predicated region
        $region17: #{tpu_custom_call.1} parent=11 // pred_check
          %p238 = pneg %p173
        $region18: #{tpu_custom_call.1} parent=11 // pred_check_branch
          %240 = sbr.rel (%p238) target = $region20
        $region19: #{tpu_custom_call.1} parent=11 // pred_region
          _
        $region20: #{tpu_custom_call.1} parent=11 // pred_fallthru
          _
        // Predicated region
        $region21: #{tpu_custom_call.1} parent=11 // pred_check
          %p241 = pneg %p194
        $region22: #{tpu_custom_call.1} parent=11 // pred_check_branch
          %243 = sbr.rel (%p241) target = $region24
        $region23: #{tpu_custom_call.1} parent=11 // pred_region
          _
        $region24: #{tpu_custom_call.1} parent=11 // pred_fallthru
          _
      $region12: #{tpu_custom_call.1} parent=5 // pred_fallthru
        _
      %p244 = scmp.lt.s32.totalorder %s13, 4
      // Predicated region
      $region25: #{tpu_custom_call.1} parent=5 // pred_check
        %p245 = pneg %p244
      $region26: #{tpu_custom_call.1} parent=5 // pred_check_branch
        %247 = sbr.rel (%p245) target = $region28
      $region27: #{tpu_custom_call.1} parent=5 // pred_region
        // Predicated region
        $region29: #{tpu_custom_call.1} parent=27 // pred_check
          %p248 = pneg %p47
        $region30: #{tpu_custom_call.1} parent=27 // pred_check_branch
          %250 = sbr.rel (%p248) target = $region32
        $region31: #{tpu_custom_call.1} parent=27 // pred_region
          %s251 = sand.u32 %s37, 1
          %s252 = sand.u32 %s37, 1
          %s253 = smul.addr %s252, 128
          %s254 = scalar_lea.vmem [#allocation4], %s253
          %s255 = smul.u32 16, %s20
          %s256 = smul.addr %s255, 2
          %s257 = sadd.s32 %s21, %s256
          %s258 = smul.addr %s257, 8
          %s259 = scalar_lea.vmem %s0, %s258
          // Predicated region
          $region33: #{tpu_custom_call.1} parent=31 // pred_check
            _
          $region34: #{tpu_custom_call.1} parent=31 // pred_check_branch
            %261 = sbr.rel (0) target = $region36
          $region35: #{tpu_custom_call.1} parent=31 // pred_region
            // Predicated region
            $region37: #{tpu_custom_call.1} parent=35 // pred_check
              _
            $region38: #{tpu_custom_call.1} parent=35 // pred_check_branch
              %263 = sbr.rel (0) target = $region40
            $region39: #{tpu_custom_call.1} parent=35 // pred_region
              // Predicated region
              $region52: #{tpu_custom_call.1} parent=39 // pred_check
                _
              $region53: #{tpu_custom_call.1} parent=39 // pred_check_branch
                %309 = sbr.rel (0) target = $region55
              $region54: #{tpu_custom_call.1} parent=39 // pred_region
                loop: start=0, step=1, limit=1
                $region56: #{tpu_custom_call.1} parent=54 // loop_pre_header
                  _
                $region57: #{tpu_custom_call.1} parent=54 // loop_header
                  %s311 = sphi 0, %s315
                  %p312 = scmp.ge.s32.totalorder %s311, 1
                  %s316 = sphi %s259, %s259
                  %s317 = sphi %s254, %s254
                $region58: #{tpu_custom_call.1} parent=54 // loop_header_branch
                  %314 = sbr.rel (%p312) target = $region62
                $region59: #{tpu_custom_call.1} parent=54 // loop_body
                  %v318 = vld [vmem:[%s316] sm:$0xff]
                  %319 = vst [vmem:[%s317] sm:$0xff] %v318
                  %v320 = vld [vmem:[%s316 + $0x10] sm:$0xff]
                  %321 = vst [vmem:[%s317 + $0x8] sm:$0xff] %v320
                  %v322 = vld [vmem:[%s316 + $0x20] sm:$0xff]
                  %323 = vst [vmem:[%s317 + $0x10] sm:$0xff] %v322
                  %v324 = vld [vmem:[%s316 + $0x30] sm:$0xff]
                  %325 = vst [vmem:[%s317 + $0x18] sm:$0xff] %v324
                  %v326 = vld [vmem:[%s316 + $0x40] sm:$0xff]
                  %327 = vst [vmem:[%s317 + $0x20] sm:$0xff] %v326
                  %v328 = vld [vmem:[%s316 + $0x50] sm:$0xff]
                  %329 = vst [vmem:[%s317 + $0x28] sm:$0xff] %v328
                  %v330 = vld [vmem:[%s316 + $0x60] sm:$0xff]
                  %331 = vst [vmem:[%s317 + $0x30] sm:$0xff] %v330
                  %v332 = vld [vmem:[%s316 + $0x70] sm:$0xff]
                  %333 = vst [vmem:[%s317 + $0x38] sm:$0xff] %v332
                  %v334 = vld [vmem:[%s316 + $0x80] sm:$0xff]
                  %335 = vst [vmem:[%s317 + $0x40] sm:$0xff] %v334
                  %v336 = vld [vmem:[%s316 + $0x90] sm:$0xff]
                  %337 = vst [vmem:[%s317 + $0x48] sm:$0xff] %v336
                  %v338 = vld [vmem:[%s316 + $0xa0] sm:$0xff]
                  %339 = vst [vmem:[%s317 + $0x50] sm:$0xff] %v338
                  %v340 = vld [vmem:[%s316 + $0xb0] sm:$0xff]
                  %341 = vst [vmem:[%s317 + $0x58] sm:$0xff] %v340
                  %v342 = vld [vmem:[%s316 + $0xc0] sm:$0xff]
                  %343 = vst [vmem:[%s317 + $0x60] sm:$0xff] %v342
                  %v344 = vld [vmem:[%s316 + $0xd0] sm:$0xff]
                  %345 = vst [vmem:[%s317 + $0x68] sm:$0xff] %v344
                  %v346 = vld [vmem:[%s316 + $0xe0] sm:$0xff]
                  %347 = vst [vmem:[%s317 + $0x70] sm:$0xff] %v346
                  %v348 = vld [vmem:[%s316 + $0xf0] sm:$0xff]
                  %349 = vst [vmem:[%s317 + $0x78] sm:$0xff] %v348
                $region60: #{tpu_custom_call.1} parent=54 // loop_footer
                  %s315 = sadd.s32 1, %s311
                $region61: #{tpu_custom_call.1} parent=54 // loop_footer_branch
                  %310 = sbr.rel target = $region57
                $region62: #{tpu_custom_call.1} parent=54 // loop_exit
                  _
              $region55: #{tpu_custom_call.1} parent=39 // pred_fallthru
                _
              // Predicated region
              $region63: #{tpu_custom_call.1} parent=39 // pred_check
                _
              $region64: #{tpu_custom_call.1} parent=39 // pred_check_branch
                %351 = sbr.rel target = $region66
              $region65: #{tpu_custom_call.1} parent=39 // pred_region
                _
              $region66: #{tpu_custom_call.1} parent=39 // pred_fallthru
                _
            $region40: #{tpu_custom_call.1} parent=35 // pred_fallthru
              _
            // Predicated region
            $region41: #{tpu_custom_call.1} parent=35 // pred_check
              _
            $region42: #{tpu_custom_call.1} parent=35 // pred_check_branch
              %265 = sbr.rel target = $region44
            $region43: #{tpu_custom_call.1} parent=35 // pred_region
              %s267 = ssub.s32 256, 1
              loop: start=0, step=1, limit=1
              $region45: #{tpu_custom_call.1} parent=43 // loop_pre_header
                _
              $region46: #{tpu_custom_call.1} parent=43 // loop_header
                %s269 = sphi 0, %s273
                %p270 = scmp.ge.s32.totalorder %s269, 1
                %s274 = sphi %s259, %s259
                %s275 = sphi %s254, %s254
              $region47: #{tpu_custom_call.1} parent=43 // loop_header_branch
                %272 = sbr.rel (%p270) target = $region51
              $region48: #{tpu_custom_call.1} parent=43 // loop_body
                %v276 = vld [vmem:[%s274] sm:%s267]
                %277 = vst [vmem:[%s275] sm:%s267] %v276
                %v278 = vld [vmem:[%s274 + $0x10] sm:%s267]
                %279 = vst [vmem:[%s275 + $0x8] sm:%s267] %v278
                %v280 = vld [vmem:[%s274 + $0x20] sm:%s267]
                %281 = vst [vmem:[%s275 + $0x10] sm:%s267] %v280
                %v282 = vld [vmem:[%s274 + $0x30] sm:%s267]
                %283 = vst [vmem:[%s275 + $0x18] sm:%s267] %v282
                %v284 = vld [vmem:[%s274 + $0x40] sm:%s267]
                %285 = vst [vmem:[%s275 + $0x20] sm:%s267] %v284
                %v286 = vld [vmem:[%s274 + $0x50] sm:%s267]
                %287 = vst [vmem:[%s275 + $0x28] sm:%s267] %v286
                %v288 = vld [vmem:[%s274 + $0x60] sm:%s267]
                %289 = vst [vmem:[%s275 + $0x30] sm:%s267] %v288
                %v290 = vld [vmem:[%s274 + $0x70] sm:%s267]
                %291 = vst [vmem:[%s275 + $0x38] sm:%s267] %v290
                %v292 = vld [vmem:[%s274 + $0x80] sm:%s267]
                %293 = vst [vmem:[%s275 + $0x40] sm:%s267] %v292
                %v294 = vld [vmem:[%s274 + $0x90] sm:%s267]
                %295 = vst [vmem:[%s275 + $0x48] sm:%s267] %v294
                %v296 = vld [vmem:[%s274 + $0xa0] sm:%s267]
                %297 = vst [vmem:[%s275 + $0x50] sm:%s267] %v296
                %v298 = vld [vmem:[%s274 + $0xb0] sm:%s267]
                %299 = vst [vmem:[%s275 + $0x58] sm:%s267] %v298
                %v300 = vld [vmem:[%s274 + $0xc0] sm:%s267]
                %301 = vst [vmem:[%s275 + $0x60] sm:%s267] %v300
                %v302 = vld [vmem:[%s274 + $0xd0] sm:%s267]
                %303 = vst [vmem:[%s275 + $0x68] sm:%s267] %v302
                %v304 = vld [vmem:[%s274 + $0xe0] sm:%s267]
                %305 = vst [vmem:[%s275 + $0x70] sm:%s267] %v304
                %v306 = vld [vmem:[%s274 + $0xf0] sm:%s267]
                %307 = vst [vmem:[%s275 + $0x78] sm:%s267] %v306
              $region49: #{tpu_custom_call.1} parent=43 // loop_footer
                %s273 = sadd.s32 1, %s269
              $region50: #{tpu_custom_call.1} parent=43 // loop_footer_branch
                %268 = sbr.rel target = $region46
              $region51: #{tpu_custom_call.1} parent=43 // loop_exit
                _
            $region44: #{tpu_custom_call.1} parent=35 // pred_fallthru
              _
          $region36: #{tpu_custom_call.1} parent=31 // pred_fallthru
            _
          %352 = vnop
        $region32: #{tpu_custom_call.1} parent=27 // pred_fallthru
          _
        // Predicated region
        $region67: #{tpu_custom_call.1} parent=27 // pred_check
          %p353 = pneg %p73
        $region68: #{tpu_custom_call.1} parent=27 // pred_check_branch
          %355 = sbr.rel (%p353) target = $region70
        $region69: #{tpu_custom_call.1} parent=27 // pred_region
          %s356 = smul.u32 16, %s21
          %p357 = scmp.lt.s32.totalorder %s356, 31
          %s358 = scalar_select %p357, %s356, 31
          %s359 = smul.addr %s358, 8
          %s360 = scalar_lea.vmem %s1, %s359
          %s361 = smul.u32 16, %s21
        $region70: #{tpu_custom_call.1} parent=27 // pred_fallthru
          _
        // Predicated region
        $region71: #{tpu_custom_call.1} parent=27 // pred_check
          %p362 = pneg %p99
        $region72: #{tpu_custom_call.1} parent=27 // pred_check_branch
          %364 = sbr.rel (%p362) target = $region74
        $region73: #{tpu_custom_call.1} parent=27 // pred_region
          %p365 = scmp.lt.s32.totalorder %s21, 1
          %s366 = scalar_select %p365, %s21, 1
          %s367 = smul.addr %s366, 8
          %s368 = scalar_lea.vmem %s2, %s367
        $region74: #{tpu_custom_call.1} parent=27 // pred_fallthru
          _
        // Predicated region
        $region75: #{tpu_custom_call.1} parent=27 // pred_check
          %p369 = pneg %p125
        $region76: #{tpu_custom_call.1} parent=27 // pred_check_branch
          %371 = sbr.rel (%p369) target = $region78
        $region77: #{tpu_custom_call.1} parent=27 // pred_region
          %s372 = smul.u32 16, %s20
          %p373 = scmp.lt.s32.totalorder %s372, 31
          %s374 = scalar_select %p373, %s372, 31
          %s375 = smul.addr %s374, 8
          %s376 = scalar_lea.vmem %s3, %s375
          %s377 = smul.u32 16, %s20
        $region78: #{tpu_custom_call.1} parent=27 // pred_fallthru
          _
      $region28: #{tpu_custom_call.1} parent=5 // pred_fallthru
        _
      %p378 = scmp.le.s32.totalorder 1, %s13
      %p379 = scmp.lt.s32.totalorder %s13, 5
      %p380 = pnand %p378, %p379
      %p381 = pneg %p380
      // Predicated region
      $region79: #{tpu_custom_call.1} parent=5 // pred_check
        _
      $region80: #{tpu_custom_call.1} parent=5 // pred_check_branch
        %383 = sbr.rel (%p380) target = $region82
      $region81: #{tpu_custom_call.1} parent=5 // pred_region
        %s384 = ssub.s32 %s13, 1
        %s385 = sand.u32 %s40, 1
        %s386 = sand.u32 %s40, 1
        %s387 = smul.addr %s386, 128
        %s388 = scalar_lea.vmem [#allocation4], %s387
        // Predicated region
        $region83: #{tpu_custom_call.1} parent=81 // pred_check
          %p389 = pneg %p53
        $region84: #{tpu_custom_call.1} parent=81 // pred_check_branch
          %391 = sbr.rel (%p389) target = $region86
        $region85: #{tpu_custom_call.1} parent=81 // pred_region
          _
        $region86: #{tpu_custom_call.1} parent=81 // pred_fallthru
          _
        %s392 = sand.u32 %s40, 1
        %s393 = sand.u32 %s40, 1
        %s394 = smul.addr %s393, 128
        %s395 = scalar_lea.vmem [#allocation4], %s394
        %p396 = pneg %p53
        %p397 = pneg %p50
        %s398 = smul.u32 16, %s23
        %p399 = scmp.lt.s32.totalorder %s398, 31
        %s400 = scalar_select %p399, %s398, 31
        %s401 = smul.addr %s400, 8
        %s402 = scalar_lea.vmem %s1, %s401
        %p403 = pneg %p79
        %p404 = pneg %p76
        %p405 = scmp.lt.s32.totalorder %s23, 1
        %s406 = scalar_select %p405, %s23, 1
        %s407 = smul.addr %s406, 8
        %s408 = scalar_lea.vmem %s2, %s407
        %p409 = pneg %p105
        %p410 = pneg %p102
        %s411 = smul.u32 16, %s22
        %p412 = scmp.lt.s32.totalorder %s411, 31
        %s413 = scalar_select %p412, %s411, 31
        %s414 = smul.addr %s413, 8
        %s415 = scalar_lea.vmem %s3, %s414
        %p416 = pneg %p131
        %p417 = pneg %p128
        %p418 = pneg %p152
        %p419 = pneg %p149
        %p420 = pneg %p173
        %p421 = pneg %p170
        %p422 = pneg %p194
        %p423 = pneg %p191
        %p424 = pneg %p220
        %p425 = pneg %p217
        %s426 = smul.u32 16, %s22
        %p427 = scmp.lt.s32.totalorder %s426, 31
        %s428 = scalar_select %p427, %s426, 31
        %s429 = smul.addr %s428, 8
        %s430 = scalar_lea.vmem %s7, %s429
        %s431 = smul.u32 16, %s22
        %s432 = smul.u32 16, %s23
        %p433 = scmp.lt.s32.totalorder %s432, 31
        %s434 = scalar_select %p433, %s432, 31
        %s435 = smul.addr %s434, 8
        %s436 = scalar_lea.vmem %s1, %s435
        %s437 = smul.u32 16, %s23
        %p438 = scmp.lt.s32.totalorder %s23, 1
        %s439 = scalar_select %p438, %s23, 1
        %s440 = smul.addr %s439, 8
        %s441 = scalar_lea.vmem %s2, %s440
        %s442 = smul.u32 16, %s22
        %p443 = scmp.lt.s32.totalorder %s442, 31
        %s444 = scalar_select %p443, %s442, 31
        %s445 = smul.addr %s444, 8
        %s446 = scalar_lea.vmem %s3, %s445
        %s447 = smul.u32 16, %s22
        %s448 = smul.u32 16, %s22
        %p449 = scmp.lt.s32.totalorder %s448, 31
        %s450 = scalar_select %p449, %s448, 31
        %s451 = smul.addr %s450, 8
        %s452 = scalar_lea.vmem %s7, %s451
        %s453 = smul.u32 16, %s22
        %p454 = scmp.eq.s32.totalorder %s23, 0
        // Predicated region
        $region87: #{tpu_custom_call.1} parent=81 // pred_check
          %p455 = pneg %p454
        $region88: #{tpu_custom_call.1} parent=81 // pred_check_branch
          %457 = sbr.rel (%p455) target = $region90
        $region89: #{tpu_custom_call.1} parent=81 // pred_region
          %vm458 = vcmask 72704
          %459 = vst.msk [vmem:[#allocation2] sm:$0xff] %vm458, 0.0
          %460 = vst.msk [vmem:[#allocation2 + $0x8] sm:$0xff] %vm458, 0.0
          %461 = vst.msk [vmem:[#allocation2 + $0x10] sm:$0xff] %vm458, 0.0
          %462 = vst.msk [vmem:[#allocation2 + $0x18] sm:$0xff] %vm458, 0.0
          %463 = vst.msk [vmem:[#allocation2 + $0x20] sm:$0xff] %vm458, 0.0
          %464 = vst.msk [vmem:[#allocation2 + $0x28] sm:$0xff] %vm458, 0.0
          %465 = vst.msk [vmem:[#allocation2 + $0x30] sm:$0xff] %vm458, 0.0
          %466 = vst.msk [vmem:[#allocation2 + $0x38] sm:$0xff] %vm458, 0.0
          %467 = vst.msk [vmem:[#allocation2 + $0x40] sm:$0xff] %vm458, 0.0
          %468 = vst.msk [vmem:[#allocation2 + $0x48] sm:$0xff] %vm458, 0.0
          %469 = vst.msk [vmem:[#allocation2 + $0x50] sm:$0xff] %vm458, 0.0
          %470 = vst.msk [vmem:[#allocation2 + $0x58] sm:$0xff] %vm458, 0.0
          %471 = vst.msk [vmem:[#allocation2 + $0x60] sm:$0xff] %vm458, 0.0
          %472 = vst.msk [vmem:[#allocation2 + $0x68] sm:$0xff] %vm458, 0.0
          %473 = vst.msk [vmem:[#allocation2 + $0x70] sm:$0xff] %vm458, 0.0
          %474 = vst.msk [vmem:[#allocation2 + $0x78] sm:$0xff] %vm458, 0.0
          %vm475 = vcmask 64512
          %476 = vst.msk [vmem:[#allocation3] sm:$0xff] %vm475, -1e+30
          %477 = vst.msk [vmem:[#allocation3 + $0x8] sm:$0xff] %vm475, -1e+30
          %478 = vst.msk [vmem:[#allocation3 + $0x10] sm:$0xff] %vm475, -1e+30
          %479 = vst.msk [vmem:[#allocation3 + $0x18] sm:$0xff] %vm475, -1e+30
          %480 = vst.msk [vmem:[#allocation3 + $0x20] sm:$0xff] %vm475, -1e+30
          %481 = vst.msk [vmem:[#allocation3 + $0x28] sm:$0xff] %vm475, -1e+30
          %482 = vst.msk [vmem:[#allocation3 + $0x30] sm:$0xff] %vm475, -1e+30
          %483 = vst.msk [vmem:[#allocation3 + $0x38] sm:$0xff] %vm475, -1e+30
          %484 = vst.msk [vmem:[#allocation3 + $0x40] sm:$0xff] %vm475, -1e+30
          %485 = vst.msk [vmem:[#allocation3 + $0x48] sm:$0xff] %vm475, -1e+30
          %486 = vst.msk [vmem:[#allocation3 + $0x50] sm:$0xff] %vm475, -1e+30
          %487 = vst.msk [vmem:[#allocation3 + $0x58] sm:$0xff] %vm475, -1e+30
          %488 = vst.msk [vmem:[#allocation3 + $0x60] sm:$0xff] %vm475, -1e+30
          %489 = vst.msk [vmem:[#allocation3 + $0x68] sm:$0xff] %vm475, -1e+30
          %490 = vst.msk [vmem:[#allocation3 + $0x70] sm:$0xff] %vm475, -1e+30
          %491 = vst.msk [vmem:[#allocation3 + $0x78] sm:$0xff] %vm475, -1e+30
        $region90: #{tpu_custom_call.1} parent=81 // pred_fallthru
          _
        %v492 = vld [vmem:[%s388] sm:$0xff]
        %v493 = vld [vmem:[%s388 + $0x8] sm:$0xff]
        %v494 = vld [vmem:[%s388 + $0x10] sm:$0xff]
        %v495 = vld [vmem:[%s388 + $0x18] sm:$0xff]
        %v496 = vld [vmem:[%s388 + $0x20] sm:$0xff]
        %v497 = vld [vmem:[%s388 + $0x28] sm:$0xff]
        %v498 = vld [vmem:[%s388 + $0x30] sm:$0xff]
        %v499 = vld [vmem:[%s388 + $0x38] sm:$0xff]
        %v500 = vld [vmem:[%s388 + $0x40] sm:$0xff]
        %v501 = vld [vmem:[%s388 + $0x48] sm:$0xff]
        %v502 = vld [vmem:[%s388 + $0x50] sm:$0xff]
        %v503 = vld [vmem:[%s388 + $0x58] sm:$0xff]
        %v504 = vld [vmem:[%s388 + $0x60] sm:$0xff]
        %v505 = vld [vmem:[%s388 + $0x68] sm:$0xff]
        %v506 = vld [vmem:[%s388 + $0x70] sm:$0xff]
        %v507 = vld [vmem:[%s388 + $0x78] sm:$0xff]
        %v508 = vld [vmem:[#allocation2] sm:$0xff]
        %v509 = vld [vmem:[#allocation2 + $0x8] sm:$0xff]
        %v510 = vld [vmem:[#allocation2 + $0x10] sm:$0xff]
        %v511 = vld [vmem:[#allocation2 + $0x18] sm:$0xff]
        %v512 = vld [vmem:[#allocation2 + $0x20] sm:$0xff]
        %v513 = vld [vmem:[#allocation2 + $0x28] sm:$0xff]
        %v514 = vld [vmem:[#allocation2 + $0x30] sm:$0xff]
        %v515 = vld [vmem:[#allocation2 + $0x38] sm:$0xff]
        %v516 = vld [vmem:[#allocation2 + $0x40] sm:$0xff]
        %v517 = vld [vmem:[#allocation2 + $0x48] sm:$0xff]
        %v518 = vld [vmem:[#allocation2 + $0x50] sm:$0xff]
        %v519 = vld [vmem:[#allocation2 + $0x58] sm:$0xff]
        %v520 = vld [vmem:[#allocation2 + $0x60] sm:$0xff]
        %v521 = vld [vmem:[#allocation2 + $0x68] sm:$0xff]
        %v522 = vld [vmem:[#allocation2 + $0x70] sm:$0xff]
        %v523 = vld [vmem:[#allocation2 + $0x78] sm:$0xff]
        %v524 = vld [vmem:[%s436] sm:$0xff]
        %v525 = vld [vmem:[%s436 + $0x8] sm:$0xff]
        %v526 = vld [vmem:[%s436 + $0x10] sm:$0xff]
        %v527 = vld [vmem:[%s436 + $0x18] sm:$0xff]
        %v528 = vld [vmem:[%s436 + $0x20] sm:$0xff]
        %v529 = vld [vmem:[%s436 + $0x28] sm:$0xff]
        %v530 = vld [vmem:[%s436 + $0x30] sm:$0xff]
        %v531 = vld [vmem:[%s436 + $0x38] sm:$0xff]
        %v532 = vld [vmem:[%s436 + $0x40] sm:$0xff]
        %v533 = vld [vmem:[%s436 + $0x48] sm:$0xff]
        %v534 = vld [vmem:[%s436 + $0x50] sm:$0xff]
        %v535 = vld [vmem:[%s436 + $0x58] sm:$0xff]
        %v536 = vld [vmem:[%s436 + $0x60] sm:$0xff]
        %v537 = vld [vmem:[%s436 + $0x68] sm:$0xff]
        %v538 = vld [vmem:[%s436 + $0x70] sm:$0xff]
        %v539 = vld [vmem:[%s436 + $0x78] sm:$0xff]
        %540 = vmatpush.msra.mxu0 %v539
        %541 = vmatpush.msra.mxu0 %v538
        %542 = vmatpush.msra.mxu0 %v537
        %543 = vmatpush.msra.mxu0 %v536
        %544 = vmatpush.msra.mxu0 %v535
        %545 = vmatpush.msra.mxu0 %v534
        %546 = vmatpush.msra.mxu0 %v533
        %547 = vmatpush.msra.mxu0 %v532
        %548 = vmatpush.msra.mxu0 %v531
        %549 = vmatpush.msra.mxu0 %v530
        %550 = vmatpush.msra.mxu0 %v529
        %551 = vmatpush.msra.mxu0 %v528
        %552 = vmatpush.msra.mxu0 %v527
        %553 = vmatpush.msra.mxu0 %v526
        %554 = vmatpush.msra.mxu0 %v525
        %555 = vmatpush.msra.mxu0 %v524
        %556 = vmatmul.f32.gmra.mxu0 %v492
        %v557 = vpop.f32.mrf.mxu0
        %v558 = vadd.f32 0.0, %v557
        %559 = vmatmul.f32.gmra.mxu0 %v493
        %v560 = vpop.f32.mrf.mxu0
        %v561 = vadd.f32 0.0, %v560
        %562 = vmatmul.f32.gmra.mxu0 %v494
        %v563 = vpop.f32.mrf.mxu0
        %v564 = vadd.f32 0.0, %v563
        %565 = vmatmul.f32.gmra.mxu0 %v495
        %v566 = vpop.f32.mrf.mxu0
        %v567 = vadd.f32 0.0, %v566
        %568 = vmatmul.f32.gmra.mxu0 %v496
        %v569 = vpop.f32.mrf.mxu0
        %v570 = vadd.f32 0.0, %v569
        %571 = vmatmul.f32.gmra.mxu0 %v497
        %v572 = vpop.f32.mrf.mxu0
        %v573 = vadd.f32 0.0, %v572
        %574 = vmatmul.f32.gmra.mxu0 %v498
        %v575 = vpop.f32.mrf.mxu0
        %v576 = vadd.f32 0.0, %v575
        %577 = vmatmul.f32.gmra.mxu0 %v499
        %v578 = vpop.f32.mrf.mxu0
        %v579 = vadd.f32 0.0, %v578
        %580 = vmatmul.f32.gmra.mxu0 %v500
        %v581 = vpop.f32.mrf.mxu0
        %v582 = vadd.f32 0.0, %v581
        %583 = vmatmul.f32.gmra.mxu0 %v501
        %v584 = vpop.f32.mrf.mxu0
        %v585 = vadd.f32 0.0, %v584
        %586 = vmatmul.f32.gmra.mxu0 %v502
        %v587 = vpop.f32.mrf.mxu0
        %v588 = vadd.f32 0.0, %v587
        %589 = vmatmul.f32.gmra.mxu0 %v503
        %v590 = vpop.f32.mrf.mxu0
        %v591 = vadd.f32 0.0, %v590
        %592 = vmatmul.f32.gmra.mxu0 %v504
        %v593 = vpop.f32.mrf.mxu0
        %v594 = vadd.f32 0.0, %v593
        %595 = vmatmul.f32.gmra.mxu0 %v505
        %v596 = vpop.f32.mrf.mxu0
        %v597 = vadd.f32 0.0, %v596
        %598 = vmatmul.f32.gmra.mxu0 %v506
        %v599 = vpop.f32.mrf.mxu0
        %v600 = vadd.f32 0.0, %v599
        %601 = vmatmul.f32.gmra.mxu0 %v507
        %v602 = vpop.f32.mrf.mxu0
        %v603 = vadd.f32 0.0, %v602
        %604 = vdwg.mxu0
        %v605 = vadd.f32 %v508, %v558
        %v606 = vadd.f32 %v509, %v561
        %v607 = vadd.f32 %v510, %v564
        %v608 = vadd.f32 %v511, %v567
        %v609 = vadd.f32 %v512, %v570
        %v610 = vadd.f32 %v513, %v573
        %v611 = vadd.f32 %v514, %v576
        %v612 = vadd.f32 %v515, %v579
        %v613 = vadd.f32 %v516, %v582
        %v614 = vadd.f32 %v517, %v585
        %v615 = vadd.f32 %v518, %v588
        %v616 = vadd.f32 %v519, %v591
        %v617 = vadd.f32 %v520, %v594
        %v618 = vadd.f32 %v521, %v597
        %v619 = vadd.f32 %v522, %v600
        %v620 = vadd.f32 %v523, %v603
        %vm621 = vcmask 72704
        %622 = vst.msk [vmem:[#allocation2] sm:$0xff] %vm621, %v605
        %623 = vst.msk [vmem:[#allocation2 + $0x8] sm:$0xff] %vm621, %v606
        %624 = vst.msk [vmem:[#allocation2 + $0x10] sm:$0xff] %vm621, %v607
        %625 = vst.msk [vmem:[#allocation2 + $0x18] sm:$0xff] %vm621, %v608
        %626 = vst.msk [vmem:[#allocation2 + $0x20] sm:$0xff] %vm621, %v609
        %627 = vst.msk [vmem:[#allocation2 + $0x28] sm:$0xff] %vm621, %v610
        %628 = vst.msk [vmem:[#allocation2 + $0x30] sm:$0xff] %vm621, %v611
        %629 = vst.msk [vmem:[#allocation2 + $0x38] sm:$0xff] %vm621, %v612
        %630 = vst.msk [vmem:[#allocation2 + $0x40] sm:$0xff] %vm621, %v613
        %631 = vst.msk [vmem:[#allocation2 + $0x48] sm:$0xff] %vm621, %v614
        %632 = vst.msk [vmem:[#allocation2 + $0x50] sm:$0xff] %vm621, %v615
        %633 = vst.msk [vmem:[#allocation2 + $0x58] sm:$0xff] %vm621, %v616
        %634 = vst.msk [vmem:[#allocation2 + $0x60] sm:$0xff] %vm621, %v617
        %635 = vst.msk [vmem:[#allocation2 + $0x68] sm:$0xff] %vm621, %v618
        %636 = vst.msk [vmem:[#allocation2 + $0x70] sm:$0xff] %vm621, %v619
        %637 = vst.msk [vmem:[#allocation2 + $0x78] sm:$0xff] %vm621, %v620
        %v638 = vld [vmem:[%s441] sm:$0xff]
        %v655 = vrot.slane %v492, 1
        %v656 = vrot.slane %v492, 2
        %v657 = vrot.slane %v492, 3
        %v658 = vrot.slane %v492, 4
        %v659 = vrot.slane %v492, 5
        %v660 = vrot.slane %v492, 6
        %v661 = vrot.slane %v492, 7
        %v662 = vrot.slane %v493, 1
        %v663 = vrot.slane %v493, 2
        %v664 = vrot.slane %v493, 3
        %v665 = vrot.slane %v493, 4
        %v666 = vrot.slane %v493, 5
        %v667 = vrot.slane %v493, 6
        %v668 = vrot.slane %v493, 7
        %v669 = vrot.slane %v494, 1
        %v670 = vrot.slane %v494, 2
        %v671 = vrot.slane %v494, 3
        %v672 = vrot.slane %v494, 4
        %v673 = vrot.slane %v494, 5
        %v674 = vrot.slane %v494, 6
        %v675 = vrot.slane %v494, 7
        %v676 = vrot.slane %v495, 1
        %v677 = vrot.slane %v495, 2
        %v678 = vrot.slane %v495, 3
        %v679 = vrot.slane %v495, 4
        %v680 = vrot.slane %v495, 5
        %v681 = vrot.slane %v495, 6
        %v682 = vrot.slane %v495, 7
        %v683 = vrot.slane %v496, 1
        %v684 = vrot.slane %v496, 2
        %v685 = vrot.slane %v496, 3
        %v686 = vrot.slane %v496, 4
        %v687 = vrot.slane %v496, 5
        %v688 = vrot.slane %v496, 6
        %v689 = vrot.slane %v496, 7
        %v690 = vrot.slane %v497, 1
        %v691 = vrot.slane %v497, 2
        %v692 = vrot.slane %v497, 3
        %v693 = vrot.slane %v497, 4
        %v694 = vrot.slane %v497, 5
        %v695 = vrot.slane %v497, 6
        %v696 = vrot.slane %v497, 7
        %v697 = vrot.slane %v498, 1
        %v698 = vrot.slane %v498, 2
        %v699 = vrot.slane %v498, 3
        %v700 = vrot.slane %v498, 4
        %v701 = vrot.slane %v498, 5
        %v702 = vrot.slane %v498, 6
        %v703 = vrot.slane %v498, 7
        %v704 = vrot.slane %v499, 1
        %v705 = vrot.slane %v499, 2
        %v706 = vrot.slane %v499, 3
        %v707 = vrot.slane %v499, 4
        %v708 = vrot.slane %v499, 5
        %v709 = vrot.slane %v499, 6
        %v710 = vrot.slane %v499, 7
        %v711 = vrot.slane %v500, 1
        %v712 = vrot.slane %v500, 2
        %v713 = vrot.slane %v500, 3
        %v714 = vrot.slane %v500, 4
        %v715 = vrot.slane %v500, 5
        %v716 = vrot.slane %v500, 6
        %v717 = vrot.slane %v500, 7
        %v718 = vrot.slane %v501, 1
        %v719 = vrot.slane %v501, 2
        %v720 = vrot.slane %v501, 3
        %v721 = vrot.slane %v501, 4
        %v722 = vrot.slane %v501, 5
        %v723 = vrot.slane %v501, 6
        %v724 = vrot.slane %v501, 7
        %v725 = vrot.slane %v502, 1
        %v726 = vrot.slane %v502, 2
        %v727 = vrot.slane %v502, 3
        %v728 = vrot.slane %v502, 4
        %v729 = vrot.slane %v502, 5
        %v730 = vrot.slane %v502, 6
        %v731 = vrot.slane %v502, 7
        %v732 = vrot.slane %v503, 1
        %v733 = vrot.slane %v503, 2
        %v734 = vrot.slane %v503, 3
        %v735 = vrot.slane %v503, 4
        %v736 = vrot.slane %v503, 5
        %v737 = vrot.slane %v503, 6
        %v738 = vrot.slane %v503, 7
        %v739 = vrot.slane %v504, 1
        %v740 = vrot.slane %v504, 2
        %v741 = vrot.slane %v504, 3
        %v742 = vrot.slane %v504, 4
        %v743 = vrot.slane %v504, 5
        %v744 = vrot.slane %v504, 6
        %v745 = vrot.slane %v504, 7
        %v746 = vrot.slane %v505, 1
        %v747 = vrot.slane %v505, 2
        %v748 = vrot.slane %v505, 3
        %v749 = vrot.slane %v505, 4
        %v750 = vrot.slane %v505, 5
        %v751 = vrot.slane %v505, 6
        %v752 = vrot.slane %v505, 7
        %v753 = vrot.slane %v506, 1
        %v754 = vrot.slane %v506, 2
        %v755 = vrot.slane %v506, 3
        %v756 = vrot.slane %v506, 4
        %v757 = vrot.slane %v506, 5
        %v758 = vrot.slane %v506, 6
        %v759 = vrot.slane %v506, 7
        %v760 = vrot.slane %v507, 1
        %v761 = vrot.slane %v507, 2
        %v762 = vrot.slane %v507, 3
        %v763 = vrot.slane %v507, 4
        %v764 = vrot.slane %v507, 5
        %v765 = vrot.slane %v507, 6
        %v766 = vrot.slane %v507, 7
        %vm879 = vcmp.gt.f32.partialorder %v492, 0.0
        %vm880 = vcmp.gt.f32.partialorder %v655, 0.0
        %vm881 = vcmp.gt.f32.partialorder %v656, 0.0
        %vm882 = vcmp.gt.f32.partialorder %v657, 0.0
        %vm883 = vcmp.gt.f32.partialorder %v658, 0.0
        %vm884 = vcmp.gt.f32.partialorder %v659, 0.0
        %vm885 = vcmp.gt.f32.partialorder %v660, 0.0
        %vm886 = vcmp.gt.f32.partialorder %v661, 0.0
        %vm887 = vcmp.gt.f32.partialorder %v493, 0.0
        %vm888 = vcmp.gt.f32.partialorder %v662, 0.0
        %vm889 = vcmp.gt.f32.partialorder %v663, 0.0
        %vm890 = vcmp.gt.f32.partialorder %v664, 0.0
        %vm891 = vcmp.gt.f32.partialorder %v665, 0.0
        %vm892 = vcmp.gt.f32.partialorder %v666, 0.0
        %vm893 = vcmp.gt.f32.partialorder %v667, 0.0
        %vm894 = vcmp.gt.f32.partialorder %v668, 0.0
        %vm895 = vcmp.gt.f32.partialorder %v494, 0.0
        %vm896 = vcmp.gt.f32.partialorder %v669, 0.0
        %vm897 = vcmp.gt.f32.partialorder %v670, 0.0
        %vm898 = vcmp.gt.f32.partialorder %v671, 0.0
        %vm899 = vcmp.gt.f32.partialorder %v672, 0.0
        %vm900 = vcmp.gt.f32.partialorder %v673, 0.0
        %vm901 = vcmp.gt.f32.partialorder %v674, 0.0
        %vm902 = vcmp.gt.f32.partialorder %v675, 0.0
        %vm903 = vcmp.gt.f32.partialorder %v495, 0.0
        %vm904 = vcmp.gt.f32.partialorder %v676, 0.0
        %vm905 = vcmp.gt.f32.partialorder %v677, 0.0
        %vm906 = vcmp.gt.f32.partialorder %v678, 0.0
        %vm907 = vcmp.gt.f32.partialorder %v679, 0.0
        %vm908 = vcmp.gt.f32.partialorder %v680, 0.0
        %vm909 = vcmp.gt.f32.partialorder %v681, 0.0
        %vm910 = vcmp.gt.f32.partialorder %v682, 0.0
        %vm911 = vcmp.gt.f32.partialorder %v496, 0.0
        %vm912 = vcmp.gt.f32.partialorder %v683, 0.0
        %vm913 = vcmp.gt.f32.partialorder %v684, 0.0
        %vm914 = vcmp.gt.f32.partialorder %v685, 0.0
        %vm915 = vcmp.gt.f32.partialorder %v686, 0.0
        %vm916 = vcmp.gt.f32.partialorder %v687, 0.0
        %vm917 = vcmp.gt.f32.partialorder %v688, 0.0
        %vm918 = vcmp.gt.f32.partialorder %v689, 0.0
        %vm919 = vcmp.gt.f32.partialorder %v497, 0.0
        %vm920 = vcmp.gt.f32.partialorder %v690, 0.0
        %vm921 = vcmp.gt.f32.partialorder %v691, 0.0
        %vm922 = vcmp.gt.f32.partialorder %v692, 0.0
        %vm923 = vcmp.gt.f32.partialorder %v693, 0.0
        %vm924 = vcmp.gt.f32.partialorder %v694, 0.0
        %vm925 = vcmp.gt.f32.partialorder %v695, 0.0
        %vm926 = vcmp.gt.f32.partialorder %v696, 0.0
        %vm927 = vcmp.gt.f32.partialorder %v498, 0.0
        %vm928 = vcmp.gt.f32.partialorder %v697, 0.0
        %vm929 = vcmp.gt.f32.partialorder %v698, 0.0
        %vm930 = vcmp.gt.f32.partialorder %v699, 0.0
        %vm931 = vcmp.gt.f32.partialorder %v700, 0.0
        %vm932 = vcmp.gt.f32.partialorder %v701, 0.0
        %vm933 = vcmp.gt.f32.partialorder %v702, 0.0
        %vm934 = vcmp.gt.f32.partialorder %v703, 0.0
        %vm935 = vcmp.gt.f32.partialorder %v499, 0.0
        %vm936 = vcmp.gt.f32.partialorder %v704, 0.0
        %vm937 = vcmp.gt.f32.partialorder %v705, 0.0
        %vm938 = vcmp.gt.f32.partialorder %v706, 0.0
        %vm939 = vcmp.gt.f32.partialorder %v707, 0.0
        %vm940 = vcmp.gt.f32.partialorder %v708, 0.0
        %vm941 = vcmp.gt.f32.partialorder %v709, 0.0
        %vm942 = vcmp.gt.f32.partialorder %v710, 0.0
        %vm943 = vcmp.gt.f32.partialorder %v500, 0.0
        %vm944 = vcmp.gt.f32.partialorder %v711, 0.0
        %vm945 = vcmp.gt.f32.partialorder %v712, 0.0
        %vm946 = vcmp.gt.f32.partialorder %v713, 0.0
        %vm947 = vcmp.gt.f32.partialorder %v714, 0.0
        %vm948 = vcmp.gt.f32.partialorder %v715, 0.0
        %vm949 = vcmp.gt.f32.partialorder %v716, 0.0
        %vm950 = vcmp.gt.f32.partialorder %v717, 0.0
        %vm951 = vcmp.gt.f32.partialorder %v501, 0.0
        %vm952 = vcmp.gt.f32.partialorder %v718, 0.0
        %vm953 = vcmp.gt.f32.partialorder %v719, 0.0
        %vm954 = vcmp.gt.f32.partialorder %v720, 0.0
        %vm955 = vcmp.gt.f32.partialorder %v721, 0.0
        %vm956 = vcmp.gt.f32.partialorder %v722, 0.0
        %vm957 = vcmp.gt.f32.partialorder %v723, 0.0
        %vm958 = vcmp.gt.f32.partialorder %v724, 0.0
        %vm959 = vcmp.gt.f32.partialorder %v502, 0.0
        %vm960 = vcmp.gt.f32.partialorder %v725, 0.0
        %vm961 = vcmp.gt.f32.partialorder %v726, 0.0
        %vm962 = vcmp.gt.f32.partialorder %v727, 0.0
        %vm963 = vcmp.gt.f32.partialorder %v728, 0.0
        %vm964 = vcmp.gt.f32.partialorder %v729, 0.0
        %vm965 = vcmp.gt.f32.partialorder %v730, 0.0
        %vm966 = vcmp.gt.f32.partialorder %v731, 0.0
        %vm967 = vcmp.gt.f32.partialorder %v503, 0.0
        %vm968 = vcmp.gt.f32.partialorder %v732, 0.0
        %vm969 = vcmp.gt.f32.partialorder %v733, 0.0
        %vm970 = vcmp.gt.f32.partialorder %v734, 0.0
        %vm971 = vcmp.gt.f32.partialorder %v735, 0.0
        %vm972 = vcmp.gt.f32.partialorder %v736, 0.0
        %vm973 = vcmp.gt.f32.partialorder %v737, 0.0
        %vm974 = vcmp.gt.f32.partialorder %v738, 0.0
        %vm975 = vcmp.gt.f32.partialorder %v504, 0.0
        %vm976 = vcmp.gt.f32.partialorder %v739, 0.0
        %vm977 = vcmp.gt.f32.partialorder %v740, 0.0
        %vm978 = vcmp.gt.f32.partialorder %v741, 0.0
        %vm979 = vcmp.gt.f32.partialorder %v742, 0.0
        %vm980 = vcmp.gt.f32.partialorder %v743, 0.0
        %vm981 = vcmp.gt.f32.partialorder %v744, 0.0
        %vm982 = vcmp.gt.f32.partialorder %v745, 0.0
        %vm983 = vcmp.gt.f32.partialorder %v505, 0.0
        %vm984 = vcmp.gt.f32.partialorder %v746, 0.0
        %vm985 = vcmp.gt.f32.partialorder %v747, 0.0
        %vm986 = vcmp.gt.f32.partialorder %v748, 0.0
        %vm987 = vcmp.gt.f32.partialorder %v749, 0.0
        %vm988 = vcmp.gt.f32.partialorder %v750, 0.0
        %vm989 = vcmp.gt.f32.partialorder %v751, 0.0
        %vm990 = vcmp.gt.f32.partialorder %v752, 0.0
        %vm991 = vcmp.gt.f32.partialorder %v506, 0.0
        %vm992 = vcmp.gt.f32.partialorder %v753, 0.0
        %vm993 = vcmp.gt.f32.partialorder %v754, 0.0
        %vm994 = vcmp.gt.f32.partialorder %v755, 0.0
        %vm995 = vcmp.gt.f32.partialorder %v756, 0.0
        %vm996 = vcmp.gt.f32.partialorder %v757, 0.0
        %vm997 = vcmp.gt.f32.partialorder %v758, 0.0
        %vm998 = vcmp.gt.f32.partialorder %v759, 0.0
        %vm999 = vcmp.gt.f32.partialorder %v507, 0.0
        %vm1000 = vcmp.gt.f32.partialorder %v760, 0.0
        %vm1001 = vcmp.gt.f32.partialorder %v761, 0.0
        %vm1002 = vcmp.gt.f32.partialorder %v762, 0.0
        %vm1003 = vcmp.gt.f32.partialorder %v763, 0.0
        %vm1004 = vcmp.gt.f32.partialorder %v764, 0.0
        %vm1005 = vcmp.gt.f32.partialorder %v765, 0.0
        %vm1006 = vcmp.gt.f32.partialorder %v766, 0.0
        %v1007 = vsel %vm879, 1, 0
        %v1008 = vsel %vm880, 1, 0
        %v1009 = vsel %vm881, 1, 0
        %v1010 = vsel %vm882, 1, 0
        %v1011 = vsel %vm883, 1, 0
        %v1012 = vsel %vm884, 1, 0
        %v1013 = vsel %vm885, 1, 0
        %v1014 = vsel %vm886, 1, 0
        %v1015 = vsel %vm887, 1, 0
        %v1016 = vsel %vm888, 1, 0
        %v1017 = vsel %vm889, 1, 0
        %v1018 = vsel %vm890, 1, 0
        %v1019 = vsel %vm891, 1, 0
        %v1020 = vsel %vm892, 1, 0
        %v1021 = vsel %vm893, 1, 0
        %v1022 = vsel %vm894, 1, 0
        %v1023 = vsel %vm895, 1, 0
        %v1024 = vsel %vm896, 1, 0
        %v1025 = vsel %vm897, 1, 0
        %v1026 = vsel %vm898, 1, 0
        %v1027 = vsel %vm899, 1, 0
        %v1028 = vsel %vm900, 1, 0
        %v1029 = vsel %vm901, 1, 0
        %v1030 = vsel %vm902, 1, 0
        %v1031 = vsel %vm903, 1, 0
        %v1032 = vsel %vm904, 1, 0
        %v1033 = vsel %vm905, 1, 0
        %v1034 = vsel %vm906, 1, 0
        %v1035 = vsel %vm907, 1, 0
        %v1036 = vsel %vm908, 1, 0
        %v1037 = vsel %vm909, 1, 0
        %v1038 = vsel %vm910, 1, 0
        %v1039 = vsel %vm911, 1, 0
        %v1040 = vsel %vm912, 1, 0
        %v1041 = vsel %vm913, 1, 0
        %v1042 = vsel %vm914, 1, 0
        %v1043 = vsel %vm915, 1, 0
        %v1044 = vsel %vm916, 1, 0
        %v1045 = vsel %vm917, 1, 0
        %v1046 = vsel %vm918, 1, 0
        %v1047 = vsel %vm919, 1, 0
        %v1048 = vsel %vm920, 1, 0
        %v1049 = vsel %vm921, 1, 0
        %v1050 = vsel %vm922, 1, 0
        %v1051 = vsel %vm923, 1, 0
        %v1052 = vsel %vm924, 1, 0
        %v1053 = vsel %vm925, 1, 0
        %v1054 = vsel %vm926, 1, 0
        %v1055 = vsel %vm927, 1, 0
        %v1056 = vsel %vm928, 1, 0
        %v1057 = vsel %vm929, 1, 0
        %v1058 = vsel %vm930, 1, 0
        %v1059 = vsel %vm931, 1, 0
        %v1060 = vsel %vm932, 1, 0
        %v1061 = vsel %vm933, 1, 0
        %v1062 = vsel %vm934, 1, 0
        %v1063 = vsel %vm935, 1, 0
        %v1064 = vsel %vm936, 1, 0
        %v1065 = vsel %vm937, 1, 0
        %v1066 = vsel %vm938, 1, 0
        %v1067 = vsel %vm939, 1, 0
        %v1068 = vsel %vm940, 1, 0
        %v1069 = vsel %vm941, 1, 0
        %v1070 = vsel %vm942, 1, 0
        %v1071 = vsel %vm943, 1, 0
        %v1072 = vsel %vm944, 1, 0
        %v1073 = vsel %vm945, 1, 0
        %v1074 = vsel %vm946, 1, 0
        %v1075 = vsel %vm947, 1, 0
        %v1076 = vsel %vm948, 1, 0
        %v1077 = vsel %vm949, 1, 0
        %v1078 = vsel %vm950, 1, 0
        %v1079 = vsel %vm951, 1, 0
        %v1080 = vsel %vm952, 1, 0
        %v1081 = vsel %vm953, 1, 0
        %v1082 = vsel %vm954, 1, 0
        %v1083 = vsel %vm955, 1, 0
        %v1084 = vsel %vm956, 1, 0
        %v1085 = vsel %vm957, 1, 0
        %v1086 = vsel %vm958, 1, 0
        %v1087 = vsel %vm959, 1, 0
        %v1088 = vsel %vm960, 1, 0
        %v1089 = vsel %vm961, 1, 0
        %v1090 = vsel %vm962, 1, 0
        %v1091 = vsel %vm963, 1, 0
        %v1092 = vsel %vm964, 1, 0
        %v1093 = vsel %vm965, 1, 0
        %v1094 = vsel %vm966, 1, 0
        %v1095 = vsel %vm967, 1, 0
        %v1096 = vsel %vm968, 1, 0
        %v1097 = vsel %vm969, 1, 0
        %v1098 = vsel %vm970, 1, 0
        %v1099 = vsel %vm971, 1, 0
        %v1100 = vsel %vm972, 1, 0
        %v1101 = vsel %vm973, 1, 0
        %v1102 = vsel %vm974, 1, 0
        %v1103 = vsel %vm975, 1, 0
        %v1104 = vsel %vm976, 1, 0
        %v1105 = vsel %vm977, 1, 0
        %v1106 = vsel %vm978, 1, 0
        %v1107 = vsel %vm979, 1, 0
        %v1108 = vsel %vm980, 1, 0
        %v1109 = vsel %vm981, 1, 0
        %v1110 = vsel %vm982, 1, 0
        %v1111 = vsel %vm983, 1, 0
        %v1112 = vsel %vm984, 1, 0
        %v1113 = vsel %vm985, 1, 0
        %v1114 = vsel %vm986, 1, 0
        %v1115 = vsel %vm987, 1, 0
        %v1116 = vsel %vm988, 1, 0
        %v1117 = vsel %vm989, 1, 0
        %v1118 = vsel %vm990, 1, 0
        %v1119 = vsel %vm991, 1, 0
        %v1120 = vsel %vm992, 1, 0
        %v1121 = vsel %vm993, 1, 0
        %v1122 = vsel %vm994, 1, 0
        %v1123 = vsel %vm995, 1, 0
        %v1124 = vsel %vm996, 1, 0
        %v1125 = vsel %vm997, 1, 0
        %v1126 = vsel %vm998, 1, 0
        %v1127 = vsel %vm999, 1, 0
        %v1128 = vsel %vm1000, 1, 0
        %v1129 = vsel %vm1001, 1, 0
        %v1130 = vsel %vm1002, 1, 0
        %v1131 = vsel %vm1003, 1, 0
        %v1132 = vsel %vm1004, 1, 0
        %v1133 = vsel %vm1005, 1, 0
        %v1134 = vsel %vm1006, 1, 0
        %v1135 = vperm.slane %v1007, 0
        %v1136 = vperm.slane %v1008, 0
        %v1137 = vperm.slane %v1009, 0
        %v1138 = vperm.slane %v1010, 0
        %v1139 = vperm.slane %v1011, 0
        %v1140 = vperm.slane %v1012, 0
        %v1141 = vperm.slane %v1013, 0
        %v1142 = vperm.slane %v1014, 0
        %v1143 = vperm.slane %v1015, 0
        %v1144 = vperm.slane %v1016, 0
        %v1145 = vperm.slane %v1017, 0
        %v1146 = vperm.slane %v1018, 0
        %v1147 = vperm.slane %v1019, 0
        %v1148 = vperm.slane %v1020, 0
        %v1149 = vperm.slane %v1021, 0
        %v1150 = vperm.slane %v1022, 0
        %v1151 = vperm.slane %v1023, 0
        %v1152 = vperm.slane %v1024, 0
        %v1153 = vperm.slane %v1025, 0
        %v1154 = vperm.slane %v1026, 0
        %v1155 = vperm.slane %v1027, 0
        %v1156 = vperm.slane %v1028, 0
        %v1157 = vperm.slane %v1029, 0
        %v1158 = vperm.slane %v1030, 0
        %v1159 = vperm.slane %v1031, 0
        %v1160 = vperm.slane %v1032, 0
        %v1161 = vperm.slane %v1033, 0
        %v1162 = vperm.slane %v1034, 0
        %v1163 = vperm.slane %v1035, 0
        %v1164 = vperm.slane %v1036, 0
        %v1165 = vperm.slane %v1037, 0
        %v1166 = vperm.slane %v1038, 0
        %v1167 = vperm.slane %v1039, 0
        %v1168 = vperm.slane %v1040, 0
        %v1169 = vperm.slane %v1041, 0
        %v1170 = vperm.slane %v1042, 0
        %v1171 = vperm.slane %v1043, 0
        %v1172 = vperm.slane %v1044, 0
        %v1173 = vperm.slane %v1045, 0
        %v1174 = vperm.slane %v1046, 0
        %v1175 = vperm.slane %v1047, 0
        %v1176 = vperm.slane %v1048, 0
        %v1177 = vperm.slane %v1049, 0
        %v1178 = vperm.slane %v1050, 0
        %v1179 = vperm.slane %v1051, 0
        %v1180 = vperm.slane %v1052, 0
        %v1181 = vperm.slane %v1053, 0
        %v1182 = vperm.slane %v1054, 0
        %v1183 = vperm.slane %v1055, 0
        %v1184 = vperm.slane %v1056, 0
        %v1185 = vperm.slane %v1057, 0
        %v1186 = vperm.slane %v1058, 0
        %v1187 = vperm.slane %v1059, 0
        %v1188 = vperm.slane %v1060, 0
        %v1189 = vperm.slane %v1061, 0
        %v1190 = vperm.slane %v1062, 0
        %v1191 = vperm.slane %v1063, 0
        %v1192 = vperm.slane %v1064, 0
        %v1193 = vperm.slane %v1065, 0
        %v1194 = vperm.slane %v1066, 0
        %v1195 = vperm.slane %v1067, 0
        %v1196 = vperm.slane %v1068, 0
        %v1197 = vperm.slane %v1069, 0
        %v1198 = vperm.slane %v1070, 0
        %v1199 = vperm.slane %v1071, 0
        %v1200 = vperm.slane %v1072, 0
        %v1201 = vperm.slane %v1073, 0
        %v1202 = vperm.slane %v1074, 0
        %v1203 = vperm.slane %v1075, 0
        %v1204 = vperm.slane %v1076, 0
        %v1205 = vperm.slane %v1077, 0
        %v1206 = vperm.slane %v1078, 0
        %v1207 = vperm.slane %v1079, 0
        %v1208 = vperm.slane %v1080, 0
        %v1209 = vperm.slane %v1081, 0
        %v1210 = vperm.slane %v1082, 0
        %v1211 = vperm.slane %v1083, 0
        %v1212 = vperm.slane %v1084, 0
        %v1213 = vperm.slane %v1085, 0
        %v1214 = vperm.slane %v1086, 0
        %v1215 = vperm.slane %v1087, 0
        %v1216 = vperm.slane %v1088, 0
        %v1217 = vperm.slane %v1089, 0
        %v1218 = vperm.slane %v1090, 0
        %v1219 = vperm.slane %v1091, 0
        %v1220 = vperm.slane %v1092, 0
        %v1221 = vperm.slane %v1093, 0
        %v1222 = vperm.slane %v1094, 0
        %v1223 = vperm.slane %v1095, 0
        %v1224 = vperm.slane %v1096, 0
        %v1225 = vperm.slane %v1097, 0
        %v1226 = vperm.slane %v1098, 0
        %v1227 = vperm.slane %v1099, 0
        %v1228 = vperm.slane %v1100, 0
        %v1229 = vperm.slane %v1101, 0
        %v1230 = vperm.slane %v1102, 0
        %v1231 = vperm.slane %v1103, 0
        %v1232 = vperm.slane %v1104, 0
        %v1233 = vperm.slane %v1105, 0
        %v1234 = vperm.slane %v1106, 0
        %v1235 = vperm.slane %v1107, 0
        %v1236 = vperm.slane %v1108, 0
        %v1237 = vperm.slane %v1109, 0
        %v1238 = vperm.slane %v1110, 0
        %v1239 = vperm.slane %v1111, 0
        %v1240 = vperm.slane %v1112, 0
        %v1241 = vperm.slane %v1113, 0
        %v1242 = vperm.slane %v1114, 0
        %v1243 = vperm.slane %v1115, 0
        %v1244 = vperm.slane %v1116, 0
        %v1245 = vperm.slane %v1117, 0
        %v1246 = vperm.slane %v1118, 0
        %v1247 = vperm.slane %v1119, 0
        %v1248 = vperm.slane %v1120, 0
        %v1249 = vperm.slane %v1121, 0
        %v1250 = vperm.slane %v1122, 0
        %v1251 = vperm.slane %v1123, 0
        %v1252 = vperm.slane %v1124, 0
        %v1253 = vperm.slane %v1125, 0
        %v1254 = vperm.slane %v1126, 0
        %v1255 = vperm.slane %v1127, 0
        %v1256 = vperm.slane %v1128, 0
        %v1257 = vperm.slane %v1129, 0
        %v1258 = vperm.slane %v1130, 0
        %v1259 = vperm.slane %v1131, 0
        %v1260 = vperm.slane %v1132, 0
        %v1261 = vperm.slane %v1133, 0
        %v1262 = vperm.slane %v1134, 0
        %vm1263 = vcmp.eq.s32.totalorder %v1135, 1
        %vm1264 = vcmp.eq.s32.totalorder %v1136, 1
        %vm1265 = vcmp.eq.s32.totalorder %v1137, 1
        %vm1266 = vcmp.eq.s32.totalorder %v1138, 1
        %vm1267 = vcmp.eq.s32.totalorder %v1139, 1
        %vm1268 = vcmp.eq.s32.totalorder %v1140, 1
        %vm1269 = vcmp.eq.s32.totalorder %v1141, 1
        %vm1270 = vcmp.eq.s32.totalorder %v1142, 1
        %vm1271 = vcmp.eq.s32.totalorder %v1143, 1
        %vm1272 = vcmp.eq.s32.totalorder %v1144, 1
        %vm1273 = vcmp.eq.s32.totalorder %v1145, 1
        %vm1274 = vcmp.eq.s32.totalorder %v1146, 1
        %vm1275 = vcmp.eq.s32.totalorder %v1147, 1
        %vm1276 = vcmp.eq.s32.totalorder %v1148, 1
        %vm1277 = vcmp.eq.s32.totalorder %v1149, 1
        %vm1278 = vcmp.eq.s32.totalorder %v1150, 1
        %vm1279 = vcmp.eq.s32.totalorder %v1151, 1
        %vm1280 = vcmp.eq.s32.totalorder %v1152, 1
        %vm1281 = vcmp.eq.s32.totalorder %v1153, 1
        %vm1282 = vcmp.eq.s32.totalorder %v1154, 1
        %vm1283 = vcmp.eq.s32.totalorder %v1155, 1
        %vm1284 = vcmp.eq.s32.totalorder %v1156, 1
        %vm1285 = vcmp.eq.s32.totalorder %v1157, 1
        %vm1286 = vcmp.eq.s32.totalorder %v1158, 1
        %vm1287 = vcmp.eq.s32.totalorder %v1159, 1
        %vm1288 = vcmp.eq.s32.totalorder %v1160, 1
        %vm1289 = vcmp.eq.s32.totalorder %v1161, 1
        %vm1290 = vcmp.eq.s32.totalorder %v1162, 1
        %vm1291 = vcmp.eq.s32.totalorder %v1163, 1
        %vm1292 = vcmp.eq.s32.totalorder %v1164, 1
        %vm1293 = vcmp.eq.s32.totalorder %v1165, 1
        %vm1294 = vcmp.eq.s32.totalorder %v1166, 1
        %vm1295 = vcmp.eq.s32.totalorder %v1167, 1
        %vm1296 = vcmp.eq.s32.totalorder %v1168, 1
        %vm1297 = vcmp.eq.s32.totalorder %v1169, 1
        %vm1298 = vcmp.eq.s32.totalorder %v1170, 1
        %vm1299 = vcmp.eq.s32.totalorder %v1171, 1
        %vm1300 = vcmp.eq.s32.totalorder %v1172, 1
        %vm1301 = vcmp.eq.s32.totalorder %v1173, 1
        %vm1302 = vcmp.eq.s32.totalorder %v1174, 1
        %vm1303 = vcmp.eq.s32.totalorder %v1175, 1
        %vm1304 = vcmp.eq.s32.totalorder %v1176, 1
        %vm1305 = vcmp.eq.s32.totalorder %v1177, 1
        %vm1306 = vcmp.eq.s32.totalorder %v1178, 1
        %vm1307 = vcmp.eq.s32.totalorder %v1179, 1
        %vm1308 = vcmp.eq.s32.totalorder %v1180, 1
        %vm1309 = vcmp.eq.s32.totalorder %v1181, 1
        %vm1310 = vcmp.eq.s32.totalorder %v1182, 1
        %vm1311 = vcmp.eq.s32.totalorder %v1183, 1
        %vm1312 = vcmp.eq.s32.totalorder %v1184, 1
        %vm1313 = vcmp.eq.s32.totalorder %v1185, 1
        %vm1314 = vcmp.eq.s32.totalorder %v1186, 1
        %vm1315 = vcmp.eq.s32.totalorder %v1187, 1
        %vm1316 = vcmp.eq.s32.totalorder %v1188, 1
        %vm1317 = vcmp.eq.s32.totalorder %v1189, 1
        %vm1318 = vcmp.eq.s32.totalorder %v1190, 1
        %vm1319 = vcmp.eq.s32.totalorder %v1191, 1
        %vm1320 = vcmp.eq.s32.totalorder %v1192, 1
        %vm1321 = vcmp.eq.s32.totalorder %v1193, 1
        %vm1322 = vcmp.eq.s32.totalorder %v1194, 1
        %vm1323 = vcmp.eq.s32.totalorder %v1195, 1
        %vm1324 = vcmp.eq.s32.totalorder %v1196, 1
        %vm1325 = vcmp.eq.s32.totalorder %v1197, 1
        %vm1326 = vcmp.eq.s32.totalorder %v1198, 1
        %vm1327 = vcmp.eq.s32.totalorder %v1199, 1
        %vm1328 = vcmp.eq.s32.totalorder %v1200, 1
        %vm1329 = vcmp.eq.s32.totalorder %v1201, 1
        %vm1330 = vcmp.eq.s32.totalorder %v1202, 1
        %vm1331 = vcmp.eq.s32.totalorder %v1203, 1
        %vm1332 = vcmp.eq.s32.totalorder %v1204, 1
        %vm1333 = vcmp.eq.s32.totalorder %v1205, 1
        %vm1334 = vcmp.eq.s32.totalorder %v1206, 1
        %vm1335 = vcmp.eq.s32.totalorder %v1207, 1
        %vm1336 = vcmp.eq.s32.totalorder %v1208, 1
        %vm1337 = vcmp.eq.s32.totalorder %v1209, 1
        %vm1338 = vcmp.eq.s32.totalorder %v1210, 1
        %vm1339 = vcmp.eq.s32.totalorder %v1211, 1
        %vm1340 = vcmp.eq.s32.totalorder %v1212, 1
        %vm1341 = vcmp.eq.s32.totalorder %v1213, 1
        %vm1342 = vcmp.eq.s32.totalorder %v1214, 1
        %vm1343 = vcmp.eq.s32.totalorder %v1215, 1
        %vm1344 = vcmp.eq.s32.totalorder %v1216, 1
        %vm1345 = vcmp.eq.s32.totalorder %v1217, 1
        %vm1346 = vcmp.eq.s32.totalorder %v1218, 1
        %vm1347 = vcmp.eq.s32.totalorder %v1219, 1
        %vm1348 = vcmp.eq.s32.totalorder %v1220, 1
        %vm1349 = vcmp.eq.s32.totalorder %v1221, 1
        %vm1350 = vcmp.eq.s32.totalorder %v1222, 1
        %vm1351 = vcmp.eq.s32.totalorder %v1223, 1
        %vm1352 = vcmp.eq.s32.totalorder %v1224, 1
        %vm1353 = vcmp.eq.s32.totalorder %v1225, 1
        %vm1354 = vcmp.eq.s32.totalorder %v1226, 1
        %vm1355 = vcmp.eq.s32.totalorder %v1227, 1
        %vm1356 = vcmp.eq.s32.totalorder %v1228, 1
        %vm1357 = vcmp.eq.s32.totalorder %v1229, 1
        %vm1358 = vcmp.eq.s32.totalorder %v1230, 1
        %vm1359 = vcmp.eq.s32.totalorder %v1231, 1
        %vm1360 = vcmp.eq.s32.totalorder %v1232, 1
        %vm1361 = vcmp.eq.s32.totalorder %v1233, 1
        %vm1362 = vcmp.eq.s32.totalorder %v1234, 1
        %vm1363 = vcmp.eq.s32.totalorder %v1235, 1
        %vm1364 = vcmp.eq.s32.totalorder %v1236, 1
        %vm1365 = vcmp.eq.s32.totalorder %v1237, 1
        %vm1366 = vcmp.eq.s32.totalorder %v1238, 1
        %vm1367 = vcmp.eq.s32.totalorder %v1239, 1
        %vm1368 = vcmp.eq.s32.totalorder %v1240, 1
        %vm1369 = vcmp.eq.s32.totalorder %v1241, 1
        %vm1370 = vcmp.eq.s32.totalorder %v1242, 1
        %vm1371 = vcmp.eq.s32.totalorder %v1243, 1
        %vm1372 = vcmp.eq.s32.totalorder %v1244, 1
        %vm1373 = vcmp.eq.s32.totalorder %v1245, 1
        %vm1374 = vcmp.eq.s32.totalorder %v1246, 1
        %vm1375 = vcmp.eq.s32.totalorder %v1247, 1
        %vm1376 = vcmp.eq.s32.totalorder %v1248, 1
        %vm1377 = vcmp.eq.s32.totalorder %v1249, 1
        %vm1378 = vcmp.eq.s32.totalorder %v1250, 1
        %vm1379 = vcmp.eq.s32.totalorder %v1251, 1
        %vm1380 = vcmp.eq.s32.totalorder %v1252, 1
        %vm1381 = vcmp.eq.s32.totalorder %v1253, 1
        %vm1382 = vcmp.eq.s32.totalorder %v1254, 1
        %vm1383 = vcmp.eq.s32.totalorder %v1255, 1
        %vm1384 = vcmp.eq.s32.totalorder %v1256, 1
        %vm1385 = vcmp.eq.s32.totalorder %v1257, 1
        %vm1386 = vcmp.eq.s32.totalorder %v1258, 1
        %vm1387 = vcmp.eq.s32.totalorder %v1259, 1
        %vm1388 = vcmp.eq.s32.totalorder %v1260, 1
        %vm1389 = vcmp.eq.s32.totalorder %v1261, 1
        %vm1390 = vcmp.eq.s32.totalorder %v1262, 1
        %v1391 = vsel %vm1263, %v638, -1e+30
        %v1392 = vsel %vm1264, %v638, -1e+30
        %v1393 = vsel %vm1265, %v638, -1e+30
        %v1394 = vsel %vm1266, %v638, -1e+30
        %v1395 = vsel %vm1267, %v638, -1e+30
        %v1396 = vsel %vm1268, %v638, -1e+30
        %v1397 = vsel %vm1269, %v638, -1e+30
        %v1398 = vsel %vm1270, %v638, -1e+30
        %v1399 = vsel %vm1271, %v638, -1e+30
        %v1400 = vsel %vm1272, %v638, -1e+30
        %v1401 = vsel %vm1273, %v638, -1e+30
        %v1402 = vsel %vm1274, %v638, -1e+30
        %v1403 = vsel %vm1275, %v638, -1e+30
        %v1404 = vsel %vm1276, %v638, -1e+30
        %v1405 = vsel %vm1277, %v638, -1e+30
        %v1406 = vsel %vm1278, %v638, -1e+30
        %v1407 = vsel %vm1279, %v638, -1e+30
        %v1408 = vsel %vm1280, %v638, -1e+30
        %v1409 = vsel %vm1281, %v638, -1e+30
        %v1410 = vsel %vm1282, %v638, -1e+30
        %v1411 = vsel %vm1283, %v638, -1e+30
        %v1412 = vsel %vm1284, %v638, -1e+30
        %v1413 = vsel %vm1285, %v638, -1e+30
        %v1414 = vsel %vm1286, %v638, -1e+30
        %v1415 = vsel %vm1287, %v638, -1e+30
        %v1416 = vsel %vm1288, %v638, -1e+30
        %v1417 = vsel %vm1289, %v638, -1e+30
        %v1418 = vsel %vm1290, %v638, -1e+30
        %v1419 = vsel %vm1291, %v638, -1e+30
        %v1420 = vsel %vm1292, %v638, -1e+30
        %v1421 = vsel %vm1293, %v638, -1e+30
        %v1422 = vsel %vm1294, %v638, -1e+30
        %v1423 = vsel %vm1295, %v638, -1e+30
        %v1424 = vsel %vm1296, %v638, -1e+30
        %v1425 = vsel %vm1297, %v638, -1e+30
        %v1426 = vsel %vm1298, %v638, -1e+30
        %v1427 = vsel %vm1299, %v638, -1e+30
        %v1428 = vsel %vm1300, %v638, -1e+30
        %v1429 = vsel %vm1301, %v638, -1e+30
        %v1430 = vsel %vm1302, %v638, -1e+30
        %v1431 = vsel %vm1303, %v638, -1e+30
        %v1432 = vsel %vm1304, %v638, -1e+30
        %v1433 = vsel %vm1305, %v638, -1e+30
        %v1434 = vsel %vm1306, %v638, -1e+30
        %v1435 = vsel %vm1307, %v638, -1e+30
        %v1436 = vsel %vm1308, %v638, -1e+30
        %v1437 = vsel %vm1309, %v638, -1e+30
        %v1438 = vsel %vm1310, %v638, -1e+30
        %v1439 = vsel %vm1311, %v638, -1e+30
        %v1440 = vsel %vm1312, %v638, -1e+30
        %v1441 = vsel %vm1313, %v638, -1e+30
        %v1442 = vsel %vm1314, %v638, -1e+30
        %v1443 = vsel %vm1315, %v638, -1e+30
        %v1444 = vsel %vm1316, %v638, -1e+30
        %v1445 = vsel %vm1317, %v638, -1e+30
        %v1446 = vsel %vm1318, %v638, -1e+30
        %v1447 = vsel %vm1319, %v638, -1e+30
        %v1448 = vsel %vm1320, %v638, -1e+30
        %v1449 = vsel %vm1321, %v638, -1e+30
        %v1450 = vsel %vm1322, %v638, -1e+30
        %v1451 = vsel %vm1323, %v638, -1e+30
        %v1452 = vsel %vm1324, %v638, -1e+30
        %v1453 = vsel %vm1325, %v638, -1e+30
        %v1454 = vsel %vm1326, %v638, -1e+30
        %v1455 = vsel %vm1327, %v638, -1e+30
        %v1456 = vsel %vm1328, %v638, -1e+30
        %v1457 = vsel %vm1329, %v638, -1e+30
        %v1458 = vsel %vm1330, %v638, -1e+30
        %v1459 = vsel %vm1331, %v638, -1e+30
        %v1460 = vsel %vm1332, %v638, -1e+30
        %v1461 = vsel %vm1333, %v638, -1e+30
        %v1462 = vsel %vm1334, %v638, -1e+30
        %v1463 = vsel %vm1335, %v638, -1e+30
        %v1464 = vsel %vm1336, %v638, -1e+30
        %v1465 = vsel %vm1337, %v638, -1e+30
        %v1466 = vsel %vm1338, %v638, -1e+30
        %v1467 = vsel %vm1339, %v638, -1e+30
        %v1468 = vsel %vm1340, %v638, -1e+30
        %v1469 = vsel %vm1341, %v638, -1e+30
        %v1470 = vsel %vm1342, %v638, -1e+30
        %v1471 = vsel %vm1343, %v638, -1e+30
        %v1472 = vsel %vm1344, %v638, -1e+30
        %v1473 = vsel %vm1345, %v638, -1e+30
        %v1474 = vsel %vm1346, %v638, -1e+30
        %v1475 = vsel %vm1347, %v638, -1e+30
        %v1476 = vsel %vm1348, %v638, -1e+30
        %v1477 = vsel %vm1349, %v638, -1e+30
        %v1478 = vsel %vm1350, %v638, -1e+30
        %v1479 = vsel %vm1351, %v638, -1e+30
        %v1480 = vsel %vm1352, %v638, -1e+30
        %v1481 = vsel %vm1353, %v638, -1e+30
        %v1482 = vsel %vm1354, %v638, -1e+30
        %v1483 = vsel %vm1355, %v638, -1e+30
        %v1484 = vsel %vm1356, %v638, -1e+30
        %v1485 = vsel %vm1357, %v638, -1e+30
        %v1486 = vsel %vm1358, %v638, -1e+30
        %v1487 = vsel %vm1359, %v638, -1e+30
        %v1488 = vsel %vm1360, %v638, -1e+30
        %v1489 = vsel %vm1361, %v638, -1e+30
        %v1490 = vsel %vm1362, %v638, -1e+30
        %v1491 = vsel %vm1363, %v638, -1e+30
        %v1492 = vsel %vm1364, %v638, -1e+30
        %v1493 = vsel %vm1365, %v638, -1e+30
        %v1494 = vsel %vm1366, %v638, -1e+30
        %v1495 = vsel %vm1367, %v638, -1e+30
        %v1496 = vsel %vm1368, %v638, -1e+30
        %v1497 = vsel %vm1369, %v638, -1e+30
        %v1498 = vsel %vm1370, %v638, -1e+30
        %v1499 = vsel %vm1371, %v638, -1e+30
        %v1500 = vsel %vm1372, %v638, -1e+30
        %v1501 = vsel %vm1373, %v638, -1e+30
        %v1502 = vsel %vm1374, %v638, -1e+30
        %v1503 = vsel %vm1375, %v638, -1e+30
        %v1504 = vsel %vm1376, %v638, -1e+30
        %v1505 = vsel %vm1377, %v638, -1e+30
        %v1506 = vsel %vm1378, %v638, -1e+30
        %v1507 = vsel %vm1379, %v638, -1e+30
        %v1508 = vsel %vm1380, %v638, -1e+30
        %v1509 = vsel %vm1381, %v638, -1e+30
        %v1510 = vsel %vm1382, %v638, -1e+30
        %v1511 = vsel %vm1383, %v638, -1e+30
        %v1512 = vsel %vm1384, %v638, -1e+30
        %v1513 = vsel %vm1385, %v638, -1e+30
        %v1514 = vsel %vm1386, %v638, -1e+30
        %v1515 = vsel %vm1387, %v638, -1e+30
        %v1516 = vsel %vm1388, %v638, -1e+30
        %v1517 = vsel %vm1389, %v638, -1e+30
        %v1518 = vsel %vm1390, %v638, -1e+30
        %v1519 = vld [vmem:[#allocation3] sm:$0xff]
        %v1520 = vld [vmem:[#allocation3 + $0x8] sm:$0xff]
        %v1521 = vld [vmem:[#allocation3 + $0x10] sm:$0xff]
        %v1522 = vld [vmem:[#allocation3 + $0x18] sm:$0xff]
        %v1523 = vld [vmem:[#allocation3 + $0x20] sm:$0xff]
        %v1524 = vld [vmem:[#allocation3 + $0x28] sm:$0xff]
        %v1525 = vld [vmem:[#allocation3 + $0x30] sm:$0xff]
        %v1526 = vld [vmem:[#allocation3 + $0x38] sm:$0xff]
        %v1527 = vld [vmem:[#allocation3 + $0x40] sm:$0xff]
        %v1528 = vld [vmem:[#allocation3 + $0x48] sm:$0xff]
        %v1529 = vld [vmem:[#allocation3 + $0x50] sm:$0xff]
        %v1530 = vld [vmem:[#allocation3 + $0x58] sm:$0xff]
        %v1531 = vld [vmem:[#allocation3 + $0x60] sm:$0xff]
        %v1532 = vld [vmem:[#allocation3 + $0x68] sm:$0xff]
        %v1533 = vld [vmem:[#allocation3 + $0x70] sm:$0xff]
        %v1534 = vld [vmem:[#allocation3 + $0x78] sm:$0xff]
        %1535 = vmax.xlane.f32.xlu0 %v1391
        %v1536 = vpop.xlane.xlu0 %1535
        %1537 = vmax.xlane.f32.xlu0 %v1392
        %v1538 = vpop.xlane.xlu0 %1537
        %1539 = vmax.xlane.f32.xlu0 %v1393
        %v1540 = vpop.xlane.xlu0 %1539
        %1541 = vmax.xlane.f32.xlu0 %v1394
        %v1542 = vpop.xlane.xlu0 %1541
        %1543 = vmax.xlane.f32.xlu0 %v1395
        %v1544 = vpop.xlane.xlu0 %1543
        %1545 = vmax.xlane.f32.xlu0 %v1396
        %v1546 = vpop.xlane.xlu0 %1545
        %1547 = vmax.xlane.f32.xlu0 %v1397
        %v1548 = vpop.xlane.xlu0 %1547
        %1549 = vmax.xlane.f32.xlu0 %v1398
        %v1550 = vpop.xlane.xlu0 %1549
        %1551 = vmax.xlane.f32.xlu0 %v1399
        %v1552 = vpop.xlane.xlu0 %1551
        %1553 = vmax.xlane.f32.xlu0 %v1400
        %v1554 = vpop.xlane.xlu0 %1553
        %1555 = vmax.xlane.f32.xlu0 %v1401
        %v1556 = vpop.xlane.xlu0 %1555
        %1557 = vmax.xlane.f32.xlu0 %v1402
        %v1558 = vpop.xlane.xlu0 %1557
        %1559 = vmax.xlane.f32.xlu0 %v1403
        %v1560 = vpop.xlane.xlu0 %1559
        %1561 = vmax.xlane.f32.xlu0 %v1404
        %v1562 = vpop.xlane.xlu0 %1561
        %1563 = vmax.xlane.f32.xlu0 %v1405
        %v1564 = vpop.xlane.xlu0 %1563
        %1565 = vmax.xlane.f32.xlu0 %v1406
        %v1566 = vpop.xlane.xlu0 %1565
        %1567 = vmax.xlane.f32.xlu0 %v1407
        %v1568 = vpop.xlane.xlu0 %1567
        %1569 = vmax.xlane.f32.xlu0 %v1408
        %v1570 = vpop.xlane.xlu0 %1569
        %1571 = vmax.xlane.f32.xlu0 %v1409
        %v1572 = vpop.xlane.xlu0 %1571
        %1573 = vmax.xlane.f32.xlu0 %v1410
        %v1574 = vpop.xlane.xlu0 %1573
        %1575 = vmax.xlane.f32.xlu0 %v1411
        %v1576 = vpop.xlane.xlu0 %1575
        %1577 = vmax.xlane.f32.xlu0 %v1412
        %v1578 = vpop.xlane.xlu0 %1577
        %1579 = vmax.xlane.f32.xlu0 %v1413
        %v1580 = vpop.xlane.xlu0 %1579
        %1581 = vmax.xlane.f32.xlu0 %v1414
        %v1582 = vpop.xlane.xlu0 %1581
        %1583 = vmax.xlane.f32.xlu0 %v1415
        %v1584 = vpop.xlane.xlu0 %1583
        %1585 = vmax.xlane.f32.xlu0 %v1416
        %v1586 = vpop.xlane.xlu0 %1585
        %1587 = vmax.xlane.f32.xlu0 %v1417
        %v1588 = vpop.xlane.xlu0 %1587
        %1589 = vmax.xlane.f32.xlu0 %v1418
        %v1590 = vpop.xlane.xlu0 %1589
        %1591 = vmax.xlane.f32.xlu0 %v1419
        %v1592 = vpop.xlane.xlu0 %1591
        %1593 = vmax.xlane.f32.xlu0 %v1420
        %v1594 = vpop.xlane.xlu0 %1593
        %1595 = vmax.xlane.f32.xlu0 %v1421
        %v1596 = vpop.xlane.xlu0 %1595
        %1597 = vmax.xlane.f32.xlu0 %v1422
        %v1598 = vpop.xlane.xlu0 %1597
        %1599 = vmax.xlane.f32.xlu0 %v1423
        %v1600 = vpop.xlane.xlu0 %1599
        %1601 = vmax.xlane.f32.xlu0 %v1424
        %v1602 = vpop.xlane.xlu0 %1601
        %1603 = vmax.xlane.f32.xlu0 %v1425
        %v1604 = vpop.xlane.xlu0 %1603
        %1605 = vmax.xlane.f32.xlu0 %v1426
        %v1606 = vpop.xlane.xlu0 %1605
        %1607 = vmax.xlane.f32.xlu0 %v1427
        %v1608 = vpop.xlane.xlu0 %1607
        %1609 = vmax.xlane.f32.xlu0 %v1428
        %v1610 = vpop.xlane.xlu0 %1609
        %1611 = vmax.xlane.f32.xlu0 %v1429
        %v1612 = vpop.xlane.xlu0 %1611
        %1613 = vmax.xlane.f32.xlu0 %v1430
        %v1614 = vpop.xlane.xlu0 %1613
        %1615 = vmax.xlane.f32.xlu0 %v1431
        %v1616 = vpop.xlane.xlu0 %1615
        %1617 = vmax.xlane.f32.xlu0 %v1432
        %v1618 = vpop.xlane.xlu0 %1617
        %1619 = vmax.xlane.f32.xlu0 %v1433
        %v1620 = vpop.xlane.xlu0 %1619
        %1621 = vmax.xlane.f32.xlu0 %v1434
        %v1622 = vpop.xlane.xlu0 %1621
        %1623 = vmax.xlane.f32.xlu0 %v1435
        %v1624 = vpop.xlane.xlu0 %1623
        %1625 = vmax.xlane.f32.xlu0 %v1436
        %v1626 = vpop.xlane.xlu0 %1625
        %1627 = vmax.xlane.f32.xlu0 %v1437
        %v1628 = vpop.xlane.xlu0 %1627
        %1629 = vmax.xlane.f32.xlu0 %v1438
        %v1630 = vpop.xlane.xlu0 %1629
        %1631 = vmax.xlane.f32.xlu0 %v1439
        %v1632 = vpop.xlane.xlu0 %1631
        %1633 = vmax.xlane.f32.xlu0 %v1440
        %v1634 = vpop.xlane.xlu0 %1633
        %1635 = vmax.xlane.f32.xlu0 %v1441
        %v1636 = vpop.xlane.xlu0 %1635
        %1637 = vmax.xlane.f32.xlu0 %v1442
        %v1638 = vpop.xlane.xlu0 %1637
        %1639 = vmax.xlane.f32.xlu0 %v1443
        %v1640 = vpop.xlane.xlu0 %1639
        %1641 = vmax.xlane.f32.xlu0 %v1444
        %v1642 = vpop.xlane.xlu0 %1641
        %1643 = vmax.xlane.f32.xlu0 %v1445
        %v1644 = vpop.xlane.xlu0 %1643
        %1645 = vmax.xlane.f32.xlu0 %v1446
        %v1646 = vpop.xlane.xlu0 %1645
        %1647 = vmax.xlane.f32.xlu0 %v1447
        %v1648 = vpop.xlane.xlu0 %1647
        %1649 = vmax.xlane.f32.xlu0 %v1448
        %v1650 = vpop.xlane.xlu0 %1649
        %1651 = vmax.xlane.f32.xlu0 %v1449
        %v1652 = vpop.xlane.xlu0 %1651
        %1653 = vmax.xlane.f32.xlu0 %v1450
        %v1654 = vpop.xlane.xlu0 %1653
        %1655 = vmax.xlane.f32.xlu0 %v1451
        %v1656 = vpop.xlane.xlu0 %1655
        %1657 = vmax.xlane.f32.xlu0 %v1452
        %v1658 = vpop.xlane.xlu0 %1657
        %1659 = vmax.xlane.f32.xlu0 %v1453
        %v1660 = vpop.xlane.xlu0 %1659
        %1661 = vmax.xlane.f32.xlu0 %v1454
        %v1662 = vpop.xlane.xlu0 %1661
        %1663 = vmax.xlane.f32.xlu0 %v1455
        %v1664 = vpop.xlane.xlu0 %1663
        %1665 = vmax.xlane.f32.xlu0 %v1456
        %v1666 = vpop.xlane.xlu0 %1665
        %1667 = vmax.xlane.f32.xlu0 %v1457
        %v1668 = vpop.xlane.xlu0 %1667
        %1669 = vmax.xlane.f32.xlu0 %v1458
        %v1670 = vpop.xlane.xlu0 %1669
        %1671 = vmax.xlane.f32.xlu0 %v1459
        %v1672 = vpop.xlane.xlu0 %1671
        %1673 = vmax.xlane.f32.xlu0 %v1460
        %v1674 = vpop.xlane.xlu0 %1673
        %1675 = vmax.xlane.f32.xlu0 %v1461
        %v1676 = vpop.xlane.xlu0 %1675
        %1677 = vmax.xlane.f32.xlu0 %v1462
        %v1678 = vpop.xlane.xlu0 %1677
        %1679 = vmax.xlane.f32.xlu0 %v1463
        %v1680 = vpop.xlane.xlu0 %1679
        %1681 = vmax.xlane.f32.xlu0 %v1464
        %v1682 = vpop.xlane.xlu0 %1681
        %1683 = vmax.xlane.f32.xlu0 %v1465
        %v1684 = vpop.xlane.xlu0 %1683
        %1685 = vmax.xlane.f32.xlu0 %v1466
        %v1686 = vpop.xlane.xlu0 %1685
        %1687 = vmax.xlane.f32.xlu0 %v1467
        %v1688 = vpop.xlane.xlu0 %1687
        %1689 = vmax.xlane.f32.xlu0 %v1468
        %v1690 = vpop.xlane.xlu0 %1689
        %1691 = vmax.xlane.f32.xlu0 %v1469
        %v1692 = vpop.xlane.xlu0 %1691
        %1693 = vmax.xlane.f32.xlu0 %v1470
        %v1694 = vpop.xlane.xlu0 %1693
        %1695 = vmax.xlane.f32.xlu0 %v1471
        %v1696 = vpop.xlane.xlu0 %1695
        %1697 = vmax.xlane.f32.xlu0 %v1472
        %v1698 = vpop.xlane.xlu0 %1697
        %1699 = vmax.xlane.f32.xlu0 %v1473
        %v1700 = vpop.xlane.xlu0 %1699
        %1701 = vmax.xlane.f32.xlu0 %v1474
        %v1702 = vpop.xlane.xlu0 %1701
        %1703 = vmax.xlane.f32.xlu0 %v1475
        %v1704 = vpop.xlane.xlu0 %1703
        %1705 = vmax.xlane.f32.xlu0 %v1476
        %v1706 = vpop.xlane.xlu0 %1705
        %1707 = vmax.xlane.f32.xlu0 %v1477
        %v1708 = vpop.xlane.xlu0 %1707
        %1709 = vmax.xlane.f32.xlu0 %v1478
        %v1710 = vpop.xlane.xlu0 %1709
        %1711 = vmax.xlane.f32.xlu0 %v1479
        %v1712 = vpop.xlane.xlu0 %1711
        %1713 = vmax.xlane.f32.xlu0 %v1480
        %v1714 = vpop.xlane.xlu0 %1713
        %1715 = vmax.xlane.f32.xlu0 %v1481
        %v1716 = vpop.xlane.xlu0 %1715
        %1717 = vmax.xlane.f32.xlu0 %v1482
        %v1718 = vpop.xlane.xlu0 %1717
        %1719 = vmax.xlane.f32.xlu0 %v1483
        %v1720 = vpop.xlane.xlu0 %1719
        %1721 = vmax.xlane.f32.xlu0 %v1484
        %v1722 = vpop.xlane.xlu0 %1721
        %1723 = vmax.xlane.f32.xlu0 %v1485
        %v1724 = vpop.xlane.xlu0 %1723
        %1725 = vmax.xlane.f32.xlu0 %v1486
        %v1726 = vpop.xlane.xlu0 %1725
        %1727 = vmax.xlane.f32.xlu0 %v1487
        %v1728 = vpop.xlane.xlu0 %1727
        %1729 = vmax.xlane.f32.xlu0 %v1488
        %v1730 = vpop.xlane.xlu0 %1729
        %1731 = vmax.xlane.f32.xlu0 %v1489
        %v1732 = vpop.xlane.xlu0 %1731
        %1733 = vmax.xlane.f32.xlu0 %v1490
        %v1734 = vpop.xlane.xlu0 %1733
        %1735 = vmax.xlane.f32.xlu0 %v1491
        %v1736 = vpop.xlane.xlu0 %1735
        %1737 = vmax.xlane.f32.xlu0 %v1492
        %v1738 = vpop.xlane.xlu0 %1737
        %1739 = vmax.xlane.f32.xlu0 %v1493
        %v1740 = vpop.xlane.xlu0 %1739
        %1741 = vmax.xlane.f32.xlu0 %v1494
        %v1742 = vpop.xlane.xlu0 %1741
        %1743 = vmax.xlane.f32.xlu0 %v1495
        %v1744 = vpop.xlane.xlu0 %1743
        %1745 = vmax.xlane.f32.xlu0 %v1496
        %v1746 = vpop.xlane.xlu0 %1745
        %1747 = vmax.xlane.f32.xlu0 %v1497
        %v1748 = vpop.xlane.xlu0 %1747
        %1749 = vmax.xlane.f32.xlu0 %v1498
        %v1750 = vpop.xlane.xlu0 %1749
        %1751 = vmax.xlane.f32.xlu0 %v1499
        %v1752 = vpop.xlane.xlu0 %1751
        %1753 = vmax.xlane.f32.xlu0 %v1500
        %v1754 = vpop.xlane.xlu0 %1753
        %1755 = vmax.xlane.f32.xlu0 %v1501
        %v1756 = vpop.xlane.xlu0 %1755
        %1757 = vmax.xlane.f32.xlu0 %v1502
        %v1758 = vpop.xlane.xlu0 %1757
        %1759 = vmax.xlane.f32.xlu0 %v1503
        %v1760 = vpop.xlane.xlu0 %1759
        %1761 = vmax.xlane.f32.xlu0 %v1504
        %v1762 = vpop.xlane.xlu0 %1761
        %1763 = vmax.xlane.f32.xlu0 %v1505
        %v1764 = vpop.xlane.xlu0 %1763
        %1765 = vmax.xlane.f32.xlu0 %v1506
        %v1766 = vpop.xlane.xlu0 %1765
        %1767 = vmax.xlane.f32.xlu0 %v1507
        %v1768 = vpop.xlane.xlu0 %1767
        %1769 = vmax.xlane.f32.xlu0 %v1508
        %v1770 = vpop.xlane.xlu0 %1769
        %1771 = vmax.xlane.f32.xlu0 %v1509
        %v1772 = vpop.xlane.xlu0 %1771
        %1773 = vmax.xlane.f32.xlu0 %v1510
        %v1774 = vpop.xlane.xlu0 %1773
        %1775 = vmax.xlane.f32.xlu0 %v1511
        %v1776 = vpop.xlane.xlu0 %1775
        %1777 = vmax.xlane.f32.xlu0 %v1512
        %v1778 = vpop.xlane.xlu0 %1777
        %1779 = vmax.xlane.f32.xlu0 %v1513
        %v1780 = vpop.xlane.xlu0 %1779
        %1781 = vmax.xlane.f32.xlu0 %v1514
        %v1782 = vpop.xlane.xlu0 %1781
        %1783 = vmax.xlane.f32.xlu0 %v1515
        %v1784 = vpop.xlane.xlu0 %1783
        %1785 = vmax.xlane.f32.xlu0 %v1516
        %v1786 = vpop.xlane.xlu0 %1785
        %1787 = vmax.xlane.f32.xlu0 %v1517
        %v1788 = vpop.xlane.xlu0 %1787
        %1789 = vmax.xlane.f32.xlu0 %v1518
        %v1790 = vpop.xlane.xlu0 %1789
        %v1919 = vlaneseq
        %v1920 = vand.u32 %v1919, 127
        %v1921 = vperm.slane %v1536, %v1920
        %v1922 = vperm.slane %v1538, %v1920
        %v1923 = vperm.slane %v1540, %v1920
        %v1924 = vperm.slane %v1542, %v1920
        %v1925 = vperm.slane %v1544, %v1920
        %v1926 = vperm.slane %v1546, %v1920
        %v1927 = vperm.slane %v1548, %v1920
        %v1928 = vperm.slane %v1550, %v1920
        %v1929 = vperm.slane %v1552, %v1920
        %v1930 = vperm.slane %v1554, %v1920
        %v1931 = vperm.slane %v1556, %v1920
        %v1932 = vperm.slane %v1558, %v1920
        %v1933 = vperm.slane %v1560, %v1920
        %v1934 = vperm.slane %v1562, %v1920
        %v1935 = vperm.slane %v1564, %v1920
        %v1936 = vperm.slane %v1566, %v1920
        %v1937 = vperm.slane %v1568, %v1920
        %v1938 = vperm.slane %v1570, %v1920
        %v1939 = vperm.slane %v1572, %v1920
        %v1940 = vperm.slane %v1574, %v1920
        %v1941 = vperm.slane %v1576, %v1920
        %v1942 = vperm.slane %v1578, %v1920
        %v1943 = vperm.slane %v1580, %v1920
        %v1944 = vperm.slane %v1582, %v1920
        %v1945 = vperm.slane %v1584, %v1920
        %v1946 = vperm.slane %v1586, %v1920
        %v1947 = vperm.slane %v1588, %v1920
        %v1948 = vperm.slane %v1590, %v1920
        %v1949 = vperm.slane %v1592, %v1920
        %v1950 = vperm.slane %v1594, %v1920
        %v1951 = vperm.slane %v1596, %v1920
        %v1952 = vperm.slane %v1598, %v1920
        %v1953 = vperm.slane %v1600, %v1920
        %v1954 = vperm.slane %v1602, %v1920
        %v1955 = vperm.slane %v1604, %v1920
        %v1956 = vperm.slane %v1606, %v1920
        %v1957 = vperm.slane %v1608, %v1920
        %v1958 = vperm.slane %v1610, %v1920
        %v1959 = vperm.slane %v1612, %v1920
        %v1960 = vperm.slane %v1614, %v1920
        %v1961 = vperm.slane %v1616, %v1920
        %v1962 = vperm.slane %v1618, %v1920
        %v1963 = vperm.slane %v1620, %v1920
        %v1964 = vperm.slane %v1622, %v1920
        %v1965 = vperm.slane %v1624, %v1920
        %v1966 = vperm.slane %v1626, %v1920
        %v1967 = vperm.slane %v1628, %v1920
        %v1968 = vperm.slane %v1630, %v1920
        %v1969 = vperm.slane %v1632, %v1920
        %v1970 = vperm.slane %v1634, %v1920
        %v1971 = vperm.slane %v1636, %v1920
        %v1972 = vperm.slane %v1638, %v1920
        %v1973 = vperm.slane %v1640, %v1920
        %v1974 = vperm.slane %v1642, %v1920
        %v1975 = vperm.slane %v1644, %v1920
        %v1976 = vperm.slane %v1646, %v1920
        %v1977 = vperm.slane %v1648, %v1920
        %v1978 = vperm.slane %v1650, %v1920
        %v1979 = vperm.slane %v1652, %v1920
        %v1980 = vperm.slane %v1654, %v1920
        %v1981 = vperm.slane %v1656, %v1920
        %v1982 = vperm.slane %v1658, %v1920
        %v1983 = vperm.slane %v1660, %v1920
        %v1984 = vperm.slane %v1662, %v1920
        %v1985 = vperm.slane %v1664, %v1920
        %v1986 = vperm.slane %v1666, %v1920
        %v1987 = vperm.slane %v1668, %v1920
        %v1988 = vperm.slane %v1670, %v1920
        %v1989 = vperm.slane %v1672, %v1920
        %v1990 = vperm.slane %v1674, %v1920
        %v1991 = vperm.slane %v1676, %v1920
        %v1992 = vperm.slane %v1678, %v1920
        %v1993 = vperm.slane %v1680, %v1920
        %v1994 = vperm.slane %v1682, %v1920
        %v1995 = vperm.slane %v1684, %v1920
        %v1996 = vperm.slane %v1686, %v1920
        %v1997 = vperm.slane %v1688, %v1920
        %v1998 = vperm.slane %v1690, %v1920
        %v1999 = vperm.slane %v1692, %v1920
        %v2000 = vperm.slane %v1694, %v1920
        %v2001 = vperm.slane %v1696, %v1920
        %v2002 = vperm.slane %v1698, %v1920
        %v2003 = vperm.slane %v1700, %v1920
        %v2004 = vperm.slane %v1702, %v1920
        %v2005 = vperm.slane %v1704, %v1920
        %v2006 = vperm.slane %v1706, %v1920
        %v2007 = vperm.slane %v1708, %v1920
        %v2008 = vperm.slane %v1710, %v1920
        %v2009 = vperm.slane %v1712, %v1920
        %v2010 = vperm.slane %v1714, %v1920
        %v2011 = vperm.slane %v1716, %v1920
        %v2012 = vperm.slane %v1718, %v1920
        %v2013 = vperm.slane %v1720, %v1920
        %v2014 = vperm.slane %v1722, %v1920
        %v2015 = vperm.slane %v1724, %v1920
        %v2016 = vperm.slane %v1726, %v1920
        %v2017 = vperm.slane %v1728, %v1920
        %v2018 = vperm.slane %v1730, %v1920
        %v2019 = vperm.slane %v1732, %v1920
        %v2020 = vperm.slane %v1734, %v1920
        %v2021 = vperm.slane %v1736, %v1920
        %v2022 = vperm.slane %v1738, %v1920
        %v2023 = vperm.slane %v1740, %v1920
        %v2024 = vperm.slane %v1742, %v1920
        %v2025 = vperm.slane %v1744, %v1920
        %v2026 = vperm.slane %v1746, %v1920
        %v2027 = vperm.slane %v1748, %v1920
        %v2028 = vperm.slane %v1750, %v1920
        %v2029 = vperm.slane %v1752, %v1920
        %v2030 = vperm.slane %v1754, %v1920
        %v2031 = vperm.slane %v1756, %v1920
        %v2032 = vperm.slane %v1758, %v1920
        %v2033 = vperm.slane %v1760, %v1920
        %v2034 = vperm.slane %v1762, %v1920
        %v2035 = vperm.slane %v1764, %v1920
        %v2036 = vperm.slane %v1766, %v1920
        %v2037 = vperm.slane %v1768, %v1920
        %v2038 = vperm.slane %v1770, %v1920
        %v2039 = vperm.slane %v1772, %v1920
        %v2040 = vperm.slane %v1774, %v1920
        %v2041 = vperm.slane %v1776, %v1920
        %v2042 = vperm.slane %v1778, %v1920
        %v2043 = vperm.slane %v1780, %v1920
        %v2044 = vperm.slane %v1782, %v1920
        %v2045 = vperm.slane %v1784, %v1920
        %v2046 = vperm.slane %v1786, %v1920
        %v2047 = vperm.slane %v1788, %v1920
        %v2048 = vperm.slane %v1790, %v1920
        %vm2049 = vcmask 1041409
        %v2050 = vsel %vm2049, %v1922, %v1921
        %vm2051 = vcmask 1042434
        %v2052 = vsel %vm2051, %v1923, %v2050
        %vm2053 = vcmask 1043459
        %v2054 = vsel %vm2053, %v1924, %v2052
        %vm2055 = vcmask 1044484
        %v2056 = vsel %vm2055, %v1925, %v2054
        %vm2057 = vcmask 1045509
        %v2058 = vsel %vm2057, %v1926, %v2056
        %vm2059 = vcmask 1046534
        %v2060 = vsel %vm2059, %v1927, %v2058
        %vm2061 = vcmask 1047559
        %v2062 = vsel %vm2061, %v1928, %v2060
        %v2063 = vsel %vm2049, %v1930, %v1929
        %v2064 = vsel %vm2051, %v1931, %v2063
        %v2065 = vsel %vm2053, %v1932, %v2064
        %v2066 = vsel %vm2055, %v1933, %v2065
        %v2067 = vsel %vm2057, %v1934, %v2066
        %v2068 = vsel %vm2059, %v1935, %v2067
        %v2069 = vsel %vm2061, %v1936, %v2068
        %v2070 = vsel %vm2049, %v1938, %v1937
        %v2071 = vsel %vm2051, %v1939, %v2070
        %v2072 = vsel %vm2053, %v1940, %v2071
        %v2073 = vsel %vm2055, %v1941, %v2072
        %v2074 = vsel %vm2057, %v1942, %v2073
        %v2075 = vsel %vm2059, %v1943, %v2074
        %v2076 = vsel %vm2061, %v1944, %v2075
        %v2077 = vsel %vm2049, %v1946, %v1945
        %v2078 = vsel %vm2051, %v1947, %v2077
        %v2079 = vsel %vm2053, %v1948, %v2078
        %v2080 = vsel %vm2055, %v1949, %v2079
        %v2081 = vsel %vm2057, %v1950, %v2080
        %v2082 = vsel %vm2059, %v1951, %v2081
        %v2083 = vsel %vm2061, %v1952, %v2082
        %v2084 = vsel %vm2049, %v1954, %v1953
        %v2085 = vsel %vm2051, %v1955, %v2084
        %v2086 = vsel %vm2053, %v1956, %v2085
        %v2087 = vsel %vm2055, %v1957, %v2086
        %v2088 = vsel %vm2057, %v1958, %v2087
        %v2089 = vsel %vm2059, %v1959, %v2088
        %v2090 = vsel %vm2061, %v1960, %v2089
        %v2091 = vsel %vm2049, %v1962, %v1961
        %v2092 = vsel %vm2051, %v1963, %v2091
        %v2093 = vsel %vm2053, %v1964, %v2092
        %v2094 = vsel %vm2055, %v1965, %v2093
        %v2095 = vsel %vm2057, %v1966, %v2094
        %v2096 = vsel %vm2059, %v1967, %v2095
        %v2097 = vsel %vm2061, %v1968, %v2096
        %v2098 = vsel %vm2049, %v1970, %v1969
        %v2099 = vsel %vm2051, %v1971, %v2098
        %v2100 = vsel %vm2053, %v1972, %v2099
        %v2101 = vsel %vm2055, %v1973, %v2100
        %v2102 = vsel %vm2057, %v1974, %v2101
        %v2103 = vsel %vm2059, %v1975, %v2102
        %v2104 = vsel %vm2061, %v1976, %v2103
        %v2105 = vsel %vm2049, %v1978, %v1977
        %v2106 = vsel %vm2051, %v1979, %v2105
        %v2107 = vsel %vm2053, %v1980, %v2106
        %v2108 = vsel %vm2055, %v1981, %v2107
        %v2109 = vsel %vm2057, %v1982, %v2108
        %v2110 = vsel %vm2059, %v1983, %v2109
        %v2111 = vsel %vm2061, %v1984, %v2110
        %v2112 = vsel %vm2049, %v1986, %v1985
        %v2113 = vsel %vm2051, %v1987, %v2112
        %v2114 = vsel %vm2053, %v1988, %v2113
        %v2115 = vsel %vm2055, %v1989, %v2114
        %v2116 = vsel %vm2057, %v1990, %v2115
        %v2117 = vsel %vm2059, %v1991, %v2116
        %v2118 = vsel %vm2061, %v1992, %v2117
        %v2119 = vsel %vm2049, %v1994, %v1993
        %v2120 = vsel %vm2051, %v1995, %v2119
        %v2121 = vsel %vm2053, %v1996, %v2120
        %v2122 = vsel %vm2055, %v1997, %v2121
        %v2123 = vsel %vm2057, %v1998, %v2122
        %v2124 = vsel %vm2059, %v1999, %v2123
        %v2125 = vsel %vm2061, %v2000, %v2124
        %v2126 = vsel %vm2049, %v2002, %v2001
        %v2127 = vsel %vm2051, %v2003, %v2126
        %v2128 = vsel %vm2053, %v2004, %v2127
        %v2129 = vsel %vm2055, %v2005, %v2128
        %v2130 = vsel %vm2057, %v2006, %v2129
        %v2131 = vsel %vm2059, %v2007, %v2130
        %v2132 = vsel %vm2061, %v2008, %v2131
        %v2133 = vsel %vm2049, %v2010, %v2009
        %v2134 = vsel %vm2051, %v2011, %v2133
        %v2135 = vsel %vm2053, %v2012, %v2134
        %v2136 = vsel %vm2055, %v2013, %v2135
        %v2137 = vsel %vm2057, %v2014, %v2136
        %v2138 = vsel %vm2059, %v2015, %v2137
        %v2139 = vsel %vm2061, %v2016, %v2138
        %v2140 = vsel %vm2049, %v2018, %v2017
        %v2141 = vsel %vm2051, %v2019, %v2140
        %v2142 = vsel %vm2053, %v2020, %v2141
        %v2143 = vsel %vm2055, %v2021, %v2142
        %v2144 = vsel %vm2057, %v2022, %v2143
        %v2145 = vsel %vm2059, %v2023, %v2144
        %v2146 = vsel %vm2061, %v2024, %v2145
        %v2147 = vsel %vm2049, %v2026, %v2025
        %v2148 = vsel %vm2051, %v2027, %v2147
        %v2149 = vsel %vm2053, %v2028, %v2148
        %v2150 = vsel %vm2055, %v2029, %v2149
        %v2151 = vsel %vm2057, %v2030, %v2150
        %v2152 = vsel %vm2059, %v2031, %v2151
        %v2153 = vsel %vm2061, %v2032, %v2152
        %v2154 = vsel %vm2049, %v2034, %v2033
        %v2155 = vsel %vm2051, %v2035, %v2154
        %v2156 = vsel %vm2053, %v2036, %v2155
        %v2157 = vsel %vm2055, %v2037, %v2156
        %v2158 = vsel %vm2057, %v2038, %v2157
        %v2159 = vsel %vm2059, %v2039, %v2158
        %v2160 = vsel %vm2061, %v2040, %v2159
        %v2161 = vsel %vm2049, %v2042, %v2041
        %v2162 = vsel %vm2051, %v2043, %v2161
        %v2163 = vsel %vm2053, %v2044, %v2162
        %v2164 = vsel %vm2055, %v2045, %v2163
        %v2165 = vsel %vm2057, %v2046, %v2164
        %v2166 = vsel %vm2059, %v2047, %v2165
        %v2167 = vsel %vm2061, %v2048, %v2166
        %v2184 = vmax.f32 %v1519, %v2062
        %v2185 = vmax.f32 %v1520, %v2069
        %v2186 = vmax.f32 %v1521, %v2076
        %v2187 = vmax.f32 %v1522, %v2083
        %v2188 = vmax.f32 %v1523, %v2090
        %v2189 = vmax.f32 %v1524, %v2097
        %v2190 = vmax.f32 %v1525, %v2104
        %v2191 = vmax.f32 %v1526, %v2111
        %v2192 = vmax.f32 %v1527, %v2118
        %v2193 = vmax.f32 %v1528, %v2125
        %v2194 = vmax.f32 %v1529, %v2132
        %v2195 = vmax.f32 %v1530, %v2139
        %v2196 = vmax.f32 %v1531, %v2146
        %v2197 = vmax.f32 %v1532, %v2153
        %v2198 = vmax.f32 %v1533, %v2160
        %v2199 = vmax.f32 %v1534, %v2167
        %vm2200 = vcmask 64512
        %2201 = vst.msk [vmem:[#allocation3] sm:$0xff] %vm2200, %v2184
        %2202 = vst.msk [vmem:[#allocation3 + $0x8] sm:$0xff] %vm2200, %v2185
        %2203 = vst.msk [vmem:[#allocation3 + $0x10] sm:$0xff] %vm2200, %v2186
        %2204 = vst.msk [vmem:[#allocation3 + $0x18] sm:$0xff] %vm2200, %v2187
        %2205 = vst.msk [vmem:[#allocation3 + $0x20] sm:$0xff] %vm2200, %v2188
        %2206 = vst.msk [vmem:[#allocation3 + $0x28] sm:$0xff] %vm2200, %v2189
        %2207 = vst.msk [vmem:[#allocation3 + $0x30] sm:$0xff] %vm2200, %v2190
        %2208 = vst.msk [vmem:[#allocation3 + $0x38] sm:$0xff] %vm2200, %v2191
        %2209 = vst.msk [vmem:[#allocation3 + $0x40] sm:$0xff] %vm2200, %v2192
        %2210 = vst.msk [vmem:[#allocation3 + $0x48] sm:$0xff] %vm2200, %v2193
        %2211 = vst.msk [vmem:[#allocation3 + $0x50] sm:$0xff] %vm2200, %v2194
        %2212 = vst.msk [vmem:[#allocation3 + $0x58] sm:$0xff] %vm2200, %v2195
        %2213 = vst.msk [vmem:[#allocation3 + $0x60] sm:$0xff] %vm2200, %v2196
        %2214 = vst.msk [vmem:[#allocation3 + $0x68] sm:$0xff] %vm2200, %v2197
        %2215 = vst.msk [vmem:[#allocation3 + $0x70] sm:$0xff] %vm2200, %v2198
        %2216 = vst.msk [vmem:[#allocation3 + $0x78] sm:$0xff] %vm2200, %v2199
        %p2217 = scmp.eq.s32.totalorder %s23, 1
        // Predicated region
        $region91: #{tpu_custom_call.1} parent=81 // pred_check
          %p2218 = pneg %p2217
        $region92: #{tpu_custom_call.1} parent=81 // pred_check_branch
          %2220 = sbr.rel (%p2218) target = $region94
        $region93: #{tpu_custom_call.1} parent=81 // pred_region
          %v2221 = vld [vmem:[#allocation2] sm:$0xff]
          %v2222 = vld [vmem:[#allocation2 + $0x8] sm:$0xff]
          %v2223 = vld [vmem:[#allocation2 + $0x10] sm:$0xff]
          %v2224 = vld [vmem:[#allocation2 + $0x18] sm:$0xff]
          %v2225 = vld [vmem:[#allocation2 + $0x20] sm:$0xff]
          %v2226 = vld [vmem:[#allocation2 + $0x28] sm:$0xff]
          %v2227 = vld [vmem:[#allocation2 + $0x30] sm:$0xff]
          %v2228 = vld [vmem:[#allocation2 + $0x38] sm:$0xff]
          %v2229 = vld [vmem:[#allocation2 + $0x40] sm:$0xff]
          %v2230 = vld [vmem:[#allocation2 + $0x48] sm:$0xff]
          %v2231 = vld [vmem:[#allocation2 + $0x50] sm:$0xff]
          %v2232 = vld [vmem:[#allocation2 + $0x58] sm:$0xff]
          %v2233 = vld [vmem:[#allocation2 + $0x60] sm:$0xff]
          %v2234 = vld [vmem:[#allocation2 + $0x68] sm:$0xff]
          %v2235 = vld [vmem:[#allocation2 + $0x70] sm:$0xff]
          %v2236 = vld [vmem:[#allocation2 + $0x78] sm:$0xff]
          %v2237 = vmax.f32 %v2221, 1.0
          %v2238 = vmax.f32 %v2222, 1.0
          %v2239 = vmax.f32 %v2223, 1.0
          %v2240 = vmax.f32 %v2224, 1.0
          %v2241 = vmax.f32 %v2225, 1.0
          %v2242 = vmax.f32 %v2226, 1.0
          %v2243 = vmax.f32 %v2227, 1.0
          %v2244 = vmax.f32 %v2228, 1.0
          %v2245 = vmax.f32 %v2229, 1.0
          %v2246 = vmax.f32 %v2230, 1.0
          %v2247 = vmax.f32 %v2231, 1.0
          %v2248 = vmax.f32 %v2232, 1.0
          %v2249 = vmax.f32 %v2233, 1.0
          %v2250 = vmax.f32 %v2234, 1.0
          %v2251 = vmax.f32 %v2235, 1.0
          %v2252 = vmax.f32 %v2236, 1.0
          %v2253 = vrcp.pop %v2237
          %v2254 = vrcp.pop %v2238
          %v2255 = vrcp.pop %v2239
          %v2256 = vrcp.pop %v2240
          %v2257 = vrcp.pop %v2241
          %v2258 = vrcp.pop %v2242
          %v2259 = vrcp.pop %v2243
          %v2260 = vrcp.pop %v2244
          %v2261 = vrcp.pop %v2245
          %v2262 = vrcp.pop %v2246
          %v2263 = vrcp.pop %v2247
          %v2264 = vrcp.pop %v2248
          %v2265 = vrcp.pop %v2249
          %v2266 = vrcp.pop %v2250
          %v2267 = vrcp.pop %v2251
          %v2268 = vrcp.pop %v2252
          %2270 = vset.pattern.permute.xlu0 8
          %2271 = vperm.xlu0 %2270, %v2253
          %v2272 = vpop.permute.xlu0 %2271
          %2275 = vset.pattern.permute.xlu0 8
          %2276 = vperm.xlu0 %2275, %v2254
          %v2277 = vpop.permute.xlu0 %2276
          %2280 = vset.pattern.permute.xlu0 8
          %2281 = vperm.xlu0 %2280, %v2255
          %v2282 = vpop.permute.xlu0 %2281
          %2285 = vset.pattern.permute.xlu0 8
          %2286 = vperm.xlu0 %2285, %v2256
          %v2287 = vpop.permute.xlu0 %2286
          %2290 = vset.pattern.permute.xlu0 8
          %2291 = vperm.xlu0 %2290, %v2257
          %v2292 = vpop.permute.xlu0 %2291
          %2295 = vset.pattern.permute.xlu0 8
          %2296 = vperm.xlu0 %2295, %v2258
          %v2297 = vpop.permute.xlu0 %2296
          %2300 = vset.pattern.permute.xlu0 8
          %2301 = vperm.xlu0 %2300, %v2259
          %v2302 = vpop.permute.xlu0 %2301
          %2305 = vset.pattern.permute.xlu0 8
          %2306 = vperm.xlu0 %2305, %v2260
          %v2307 = vpop.permute.xlu0 %2306
          %2310 = vset.pattern.permute.xlu0 8
          %2311 = vperm.xlu0 %2310, %v2261
          %v2312 = vpop.permute.xlu0 %2311
          %2315 = vset.pattern.permute.xlu0 8
          %2316 = vperm.xlu0 %2315, %v2262
          %v2317 = vpop.permute.xlu0 %2316
          %2320 = vset.pattern.permute.xlu0 8
          %2321 = vperm.xlu0 %2320, %v2263
          %v2322 = vpop.permute.xlu0 %2321
          %2325 = vset.pattern.permute.xlu0 8
          %2326 = vperm.xlu0 %2325, %v2264
          %v2327 = vpop.permute.xlu0 %2326
          %2330 = vset.pattern.permute.xlu0 8
          %2331 = vperm.xlu0 %2330, %v2265
          %v2332 = vpop.permute.xlu0 %2331
          %2335 = vset.pattern.permute.xlu0 8
          %2336 = vperm.xlu0 %2335, %v2266
          %v2337 = vpop.permute.xlu0 %2336
          %2340 = vset.pattern.permute.xlu0 8
          %2341 = vperm.xlu0 %2340, %v2267
          %v2342 = vpop.permute.xlu0 %2341
          %2345 = vset.pattern.permute.xlu0 8
          %2346 = vperm.xlu0 %2345, %v2268
          %v2347 = vpop.permute.xlu0 %2346
          %v2349 = vmul.f32 %v2221, %v2272
          %v2350 = vmul.f32 %v2222, %v2277
          %v2351 = vmul.f32 %v2223, %v2282
          %v2352 = vmul.f32 %v2224, %v2287
          %v2353 = vmul.f32 %v2225, %v2292
          %v2354 = vmul.f32 %v2226, %v2297
          %v2355 = vmul.f32 %v2227, %v2302
          %v2356 = vmul.f32 %v2228, %v2307
          %v2357 = vmul.f32 %v2229, %v2312
          %v2358 = vmul.f32 %v2230, %v2317
          %v2359 = vmul.f32 %v2231, %v2322
          %v2360 = vmul.f32 %v2232, %v2327
          %v2361 = vmul.f32 %v2233, %v2332
          %v2362 = vmul.f32 %v2234, %v2337
          %v2363 = vmul.f32 %v2235, %v2342
          %v2364 = vmul.f32 %v2236, %v2347
          %vm2365 = vcmp.gt.f32.partialorder %v2221, 0.0
          %vm2366 = vcmp.gt.f32.partialorder %v2222, 0.0
          %vm2367 = vcmp.gt.f32.partialorder %v2223, 0.0
          %vm2368 = vcmp.gt.f32.partialorder %v2224, 0.0
          %vm2369 = vcmp.gt.f32.partialorder %v2225, 0.0
          %vm2370 = vcmp.gt.f32.partialorder %v2226, 0.0
          %vm2371 = vcmp.gt.f32.partialorder %v2227, 0.0
          %vm2372 = vcmp.gt.f32.partialorder %v2228, 0.0
          %vm2373 = vcmp.gt.f32.partialorder %v2229, 0.0
          %vm2374 = vcmp.gt.f32.partialorder %v2230, 0.0
          %vm2375 = vcmp.gt.f32.partialorder %v2231, 0.0
          %vm2376 = vcmp.gt.f32.partialorder %v2232, 0.0
          %vm2377 = vcmp.gt.f32.partialorder %v2233, 0.0
          %vm2378 = vcmp.gt.f32.partialorder %v2234, 0.0
          %vm2379 = vcmp.gt.f32.partialorder %v2235, 0.0
          %vm2380 = vcmp.gt.f32.partialorder %v2236, 0.0
          %v2381 = vld [vmem:[#allocation3] sm:$0xff]
          %v2382 = vld [vmem:[#allocation3 + $0x8] sm:$0xff]
          %v2383 = vld [vmem:[#allocation3 + $0x10] sm:$0xff]
          %v2384 = vld [vmem:[#allocation3 + $0x18] sm:$0xff]
          %v2385 = vld [vmem:[#allocation3 + $0x20] sm:$0xff]
          %v2386 = vld [vmem:[#allocation3 + $0x28] sm:$0xff]
          %v2387 = vld [vmem:[#allocation3 + $0x30] sm:$0xff]
          %v2388 = vld [vmem:[#allocation3 + $0x38] sm:$0xff]
          %v2389 = vld [vmem:[#allocation3 + $0x40] sm:$0xff]
          %v2390 = vld [vmem:[#allocation3 + $0x48] sm:$0xff]
          %v2391 = vld [vmem:[#allocation3 + $0x50] sm:$0xff]
          %v2392 = vld [vmem:[#allocation3 + $0x58] sm:$0xff]
          %v2393 = vld [vmem:[#allocation3 + $0x60] sm:$0xff]
          %v2394 = vld [vmem:[#allocation3 + $0x68] sm:$0xff]
          %v2395 = vld [vmem:[#allocation3 + $0x70] sm:$0xff]
          %v2396 = vld [vmem:[#allocation3 + $0x78] sm:$0xff]
          %v2397 = vsel %vm2365, 1, 0
          %v2398 = vsel %vm2366, 1, 0
          %v2399 = vsel %vm2367, 1, 0
          %v2400 = vsel %vm2368, 1, 0
          %v2401 = vsel %vm2369, 1, 0
          %v2402 = vsel %vm2370, 1, 0
          %v2403 = vsel %vm2371, 1, 0
          %v2404 = vsel %vm2372, 1, 0
          %v2405 = vsel %vm2373, 1, 0
          %v2406 = vsel %vm2374, 1, 0
          %v2407 = vsel %vm2375, 1, 0
          %v2408 = vsel %vm2376, 1, 0
          %v2409 = vsel %vm2377, 1, 0
          %v2410 = vsel %vm2378, 1, 0
          %v2411 = vsel %vm2379, 1, 0
          %v2412 = vsel %vm2380, 1, 0
          %2413 = vset.pattern.permute.xlu0 8
          %2414 = vperm.xlu0 %2413, %v2397
          %v2415 = vpop.permute.xlu0 %2414
          %2416 = vset.pattern.permute.xlu0 8
          %2417 = vperm.xlu0 %2416, %v2398
          %v2418 = vpop.permute.xlu0 %2417
          %2419 = vset.pattern.permute.xlu0 8
          %2420 = vperm.xlu0 %2419, %v2399
          %v2421 = vpop.permute.xlu0 %2420
          %2422 = vset.pattern.permute.xlu0 8
          %2423 = vperm.xlu0 %2422, %v2400
          %v2424 = vpop.permute.xlu0 %2423
          %2425 = vset.pattern.permute.xlu0 8
          %2426 = vperm.xlu0 %2425, %v2401
          %v2427 = vpop.permute.xlu0 %2426
          %2428 = vset.pattern.permute.xlu0 8
          %2429 = vperm.xlu0 %2428, %v2402
          %v2430 = vpop.permute.xlu0 %2429
          %2431 = vset.pattern.permute.xlu0 8
          %2432 = vperm.xlu0 %2431, %v2403
          %v2433 = vpop.permute.xlu0 %2432
          %2434 = vset.pattern.permute.xlu0 8
          %2435 = vperm.xlu0 %2434, %v2404
          %v2436 = vpop.permute.xlu0 %2435
          %2437 = vset.pattern.permute.xlu0 8
          %2438 = vperm.xlu0 %2437, %v2405
          %v2439 = vpop.permute.xlu0 %2438
          %2440 = vset.pattern.permute.xlu0 8
          %2441 = vperm.xlu0 %2440, %v2406
          %v2442 = vpop.permute.xlu0 %2441
          %2443 = vset.pattern.permute.xlu0 8
          %2444 = vperm.xlu0 %2443, %v2407
          %v2445 = vpop.permute.xlu0 %2444
          %2446 = vset.pattern.permute.xlu0 8
          %2447 = vperm.xlu0 %2446, %v2408
          %v2448 = vpop.permute.xlu0 %2447
          %2449 = vset.pattern.permute.xlu0 8
          %2450 = vperm.xlu0 %2449, %v2409
          %v2451 = vpop.permute.xlu0 %2450
          %2452 = vset.pattern.permute.xlu0 8
          %2453 = vperm.xlu0 %2452, %v2410
          %v2454 = vpop.permute.xlu0 %2453
          %2455 = vset.pattern.permute.xlu0 8
          %2456 = vperm.xlu0 %2455, %v2411
          %v2457 = vpop.permute.xlu0 %2456
          %2458 = vset.pattern.permute.xlu0 8
          %2459 = vperm.xlu0 %2458, %v2412
          %v2460 = vpop.permute.xlu0 %2459
          %vm2461 = vcmp.eq.s32.totalorder %v2415, 1
          %vm2462 = vcmp.eq.s32.totalorder %v2418, 1
          %vm2463 = vcmp.eq.s32.totalorder %v2421, 1
          %vm2464 = vcmp.eq.s32.totalorder %v2424, 1
          %vm2465 = vcmp.eq.s32.totalorder %v2427, 1
          %vm2466 = vcmp.eq.s32.totalorder %v2430, 1
          %vm2467 = vcmp.eq.s32.totalorder %v2433, 1
          %vm2468 = vcmp.eq.s32.totalorder %v2436, 1
          %vm2469 = vcmp.eq.s32.totalorder %v2439, 1
          %vm2470 = vcmp.eq.s32.totalorder %v2442, 1
          %vm2471 = vcmp.eq.s32.totalorder %v2445, 1
          %vm2472 = vcmp.eq.s32.totalorder %v2448, 1
          %vm2473 = vcmp.eq.s32.totalorder %v2451, 1
          %vm2474 = vcmp.eq.s32.totalorder %v2454, 1
          %vm2475 = vcmp.eq.s32.totalorder %v2457, 1
          %vm2476 = vcmp.eq.s32.totalorder %v2460, 1
          %v2477 = vsel %vm2461, %v2381, 0.0
          %v2478 = vsel %vm2462, %v2382, 0.0
          %v2479 = vsel %vm2463, %v2383, 0.0
          %v2480 = vsel %vm2464, %v2384, 0.0
          %v2481 = vsel %vm2465, %v2385, 0.0
          %v2482 = vsel %vm2466, %v2386, 0.0
          %v2483 = vsel %vm2467, %v2387, 0.0
          %v2484 = vsel %vm2468, %v2388, 0.0
          %v2485 = vsel %vm2469, %v2389, 0.0
          %v2486 = vsel %vm2470, %v2390, 0.0
          %v2487 = vsel %vm2471, %v2391, 0.0
          %v2488 = vsel %vm2472, %v2392, 0.0
          %v2489 = vsel %vm2473, %v2393, 0.0
          %v2490 = vsel %vm2474, %v2394, 0.0
          %v2491 = vsel %vm2475, %v2395, 0.0
          %v2492 = vsel %vm2476, %v2396, 0.0
          %v2493 = vld [vmem:[%s4] sm:$0xff]
          %v2494 = vld [vmem:[%s5] sm:$0xff]
          %v2496 = vsel %vm2200, %v2349, 0
          %v2499 = vsel %vm2200, %v2350, 0
          %v2502 = vsel %vm2200, %v2351, 0
          %v2505 = vsel %vm2200, %v2352, 0
          %v2508 = vsel %vm2200, %v2353, 0
          %v2511 = vsel %vm2200, %v2354, 0
          %v2514 = vsel %vm2200, %v2355, 0
          %v2517 = vsel %vm2200, %v2356, 0
          %v2520 = vsel %vm2200, %v2357, 0
          %v2523 = vsel %vm2200, %v2358, 0
          %v2526 = vsel %vm2200, %v2359, 0
          %v2529 = vsel %vm2200, %v2360, 0
          %v2532 = vsel %vm2200, %v2361, 0
          %v2535 = vsel %vm2200, %v2362, 0
          %v2538 = vsel %vm2200, %v2363, 0
          %v2541 = vsel %vm2200, %v2364, 0
          %2543 = vmatpush.msra.mxu0 0.0
          %2544 = vmatpush.msra.mxu0 0.0
          %2545 = vmatpush.msra.mxu0 0.0
          %2546 = vmatpush.msra.mxu0 0.0
          %2547 = vmatpush.msra.mxu0 0.0
          %2548 = vmatpush.msra.mxu0 0.0
          %2549 = vmatpush.msra.mxu0 0.0
          %2550 = vmatpush.msra.mxu0 0.0
          %2551 = vmatpush.msra.mxu0 0.0
          %2552 = vmatpush.msra.mxu0 0.0
          %2553 = vmatpush.msra.mxu0 0.0
          %2554 = vmatpush.msra.mxu0 0.0
          %2555 = vmatpush.msra.mxu0 0.0
          %2556 = vmatpush.msra.mxu0 0.0
          %2557 = vmatpush.msra.mxu0 0.0
          %2558 = vmatpush.msra.mxu0 %v2494
          %2559 = vmatmul.f32.gmra.mxu0 %v2496
          %v2560 = vpop.f32.mrf.mxu0
          %v2561 = vadd.f32 0.0, %v2560
          %2562 = vmatmul.f32.gmra.mxu0 %v2499
          %v2563 = vpop.f32.mrf.mxu0
          %v2564 = vadd.f32 0.0, %v2563
          %2565 = vmatmul.f32.gmra.mxu0 %v2502
          %v2566 = vpop.f32.mrf.mxu0
          %v2567 = vadd.f32 0.0, %v2566
          %2568 = vmatmul.f32.gmra.mxu0 %v2505
          %v2569 = vpop.f32.mrf.mxu0
          %v2570 = vadd.f32 0.0, %v2569
          %2571 = vmatmul.f32.gmra.mxu0 %v2508
          %v2572 = vpop.f32.mrf.mxu0
          %v2573 = vadd.f32 0.0, %v2572
          %2574 = vmatmul.f32.gmra.mxu0 %v2511
          %v2575 = vpop.f32.mrf.mxu0
          %v2576 = vadd.f32 0.0, %v2575
          %2577 = vmatmul.f32.gmra.mxu0 %v2514
          %v2578 = vpop.f32.mrf.mxu0
          %v2579 = vadd.f32 0.0, %v2578
          %2580 = vmatmul.f32.gmra.mxu0 %v2517
          %v2581 = vpop.f32.mrf.mxu0
          %v2582 = vadd.f32 0.0, %v2581
          %2583 = vmatmul.f32.gmra.mxu0 %v2520
          %v2584 = vpop.f32.mrf.mxu0
          %v2585 = vadd.f32 0.0, %v2584
          %2586 = vmatmul.f32.gmra.mxu0 %v2523
          %v2587 = vpop.f32.mrf.mxu0
          %v2588 = vadd.f32 0.0, %v2587
          %2589 = vmatmul.f32.gmra.mxu0 %v2526
          %v2590 = vpop.f32.mrf.mxu0
          %v2591 = vadd.f32 0.0, %v2590
          %2592 = vmatmul.f32.gmra.mxu0 %v2529
          %v2593 = vpop.f32.mrf.mxu0
          %v2594 = vadd.f32 0.0, %v2593
          %2595 = vmatmul.f32.gmra.mxu0 %v2532
          %v2596 = vpop.f32.mrf.mxu0
          %v2597 = vadd.f32 0.0, %v2596
          %2598 = vmatmul.f32.gmra.mxu0 %v2535
          %v2599 = vpop.f32.mrf.mxu0
          %v2600 = vadd.f32 0.0, %v2599
          %2601 = vmatmul.f32.gmra.mxu0 %v2538
          %v2602 = vpop.f32.mrf.mxu0
          %v2603 = vadd.f32 0.0, %v2602
          %2604 = vmatmul.f32.gmra.mxu0 %v2541
          %v2605 = vpop.f32.mrf.mxu0
          %v2606 = vadd.f32 0.0, %v2605
          %2607 = vdwg.mxu0
          %v2609 = vsel %vm2200, %v2477, 0
          %v2612 = vsel %vm2200, %v2478, 0
          %v2615 = vsel %vm2200, %v2479, 0
          %v2618 = vsel %vm2200, %v2480, 0
          %v2621 = vsel %vm2200, %v2481, 0
          %v2624 = vsel %vm2200, %v2482, 0
          %v2627 = vsel %vm2200, %v2483, 0
          %v2630 = vsel %vm2200, %v2484, 0
          %v2633 = vsel %vm2200, %v2485, 0
          %v2636 = vsel %vm2200, %v2486, 0
          %v2639 = vsel %vm2200, %v2487, 0
          %v2642 = vsel %vm2200, %v2488, 0
          %v2645 = vsel %vm2200, %v2489, 0
          %v2648 = vsel %vm2200, %v2490, 0
          %v2651 = vsel %vm2200, %v2491, 0
          %v2654 = vsel %vm2200, %v2492, 0
          %2656 = vmatpush.msra.mxu0 0.0
          %2657 = vmatpush.msra.mxu0 0.0
          %2658 = vmatpush.msra.mxu0 0.0
          %2659 = vmatpush.msra.mxu0 0.0
          %2660 = vmatpush.msra.mxu0 0.0
          %2661 = vmatpush.msra.mxu0 0.0
          %2662 = vmatpush.msra.mxu0 0.0
          %2663 = vmatpush.msra.mxu0 0.0
          %2664 = vmatpush.msra.mxu0 0.0
          %2665 = vmatpush.msra.mxu0 0.0
          %2666 = vmatpush.msra.mxu0 0.0
          %2667 = vmatpush.msra.mxu0 0.0
          %2668 = vmatpush.msra.mxu0 0.0
          %2669 = vmatpush.msra.mxu0 0.0
          %2670 = vmatpush.msra.mxu0 0.0
          %2671 = vmatpush.msra.mxu0 %v2493
          %2672 = vmatmul.f32.gmra.mxu0 %v2609
          %v2673 = vpop.f32.mrf.mxu0
          %v2674 = vadd.f32 %v2561, %v2673
          %2675 = vmatmul.f32.gmra.mxu0 %v2612
          %v2676 = vpop.f32.mrf.mxu0
          %v2677 = vadd.f32 %v2564, %v2676
          %2678 = vmatmul.f32.gmra.mxu0 %v2615
          %v2679 = vpop.f32.mrf.mxu0
          %v2680 = vadd.f32 %v2567, %v2679
          %2681 = vmatmul.f32.gmra.mxu0 %v2618
          %v2682 = vpop.f32.mrf.mxu0
          %v2683 = vadd.f32 %v2570, %v2682
          %2684 = vmatmul.f32.gmra.mxu0 %v2621
          %v2685 = vpop.f32.mrf.mxu0
          %v2686 = vadd.f32 %v2573, %v2685
          %2687 = vmatmul.f32.gmra.mxu0 %v2624
          %v2688 = vpop.f32.mrf.mxu0
          %v2689 = vadd.f32 %v2576, %v2688
          %2690 = vmatmul.f32.gmra.mxu0 %v2627
          %v2691 = vpop.f32.mrf.mxu0
          %v2692 = vadd.f32 %v2579, %v2691
          %2693 = vmatmul.f32.gmra.mxu0 %v2630
          %v2694 = vpop.f32.mrf.mxu0
          %v2695 = vadd.f32 %v2582, %v2694
          %2696 = vmatmul.f32.gmra.mxu0 %v2633
          %v2697 = vpop.f32.mrf.mxu0
          %v2698 = vadd.f32 %v2585, %v2697
          %2699 = vmatmul.f32.gmra.mxu0 %v2636
          %v2700 = vpop.f32.mrf.mxu0
          %v2701 = vadd.f32 %v2588, %v2700
          %2702 = vmatmul.f32.gmra.mxu0 %v2639
          %v2703 = vpop.f32.mrf.mxu0
          %v2704 = vadd.f32 %v2591, %v2703
          %2705 = vmatmul.f32.gmra.mxu0 %v2642
          %v2706 = vpop.f32.mrf.mxu0
          %v2707 = vadd.f32 %v2594, %v2706
          %2708 = vmatmul.f32.gmra.mxu0 %v2645
          %v2709 = vpop.f32.mrf.mxu0
          %v2710 = vadd.f32 %v2597, %v2709
          %2711 = vmatmul.f32.gmra.mxu0 %v2648
          %v2712 = vpop.f32.mrf.mxu0
          %v2713 = vadd.f32 %v2600, %v2712
          %2714 = vmatmul.f32.gmra.mxu0 %v2651
          %v2715 = vpop.f32.mrf.mxu0
          %v2716 = vadd.f32 %v2603, %v2715
          %2717 = vmatmul.f32.gmra.mxu0 %v2654
          %v2718 = vpop.f32.mrf.mxu0
          %v2719 = vadd.f32 %v2606, %v2718
          %2720 = vdwg.mxu0
          %v2721 = vld [vmem:[%s446] sm:$0xff]
          %v2722 = vld [vmem:[%s446 + $0x8] sm:$0xff]
          %v2723 = vld [vmem:[%s446 + $0x10] sm:$0xff]
          %v2724 = vld [vmem:[%s446 + $0x18] sm:$0xff]
          %v2725 = vld [vmem:[%s446 + $0x20] sm:$0xff]
          %v2726 = vld [vmem:[%s446 + $0x28] sm:$0xff]
          %v2727 = vld [vmem:[%s446 + $0x30] sm:$0xff]
          %v2728 = vld [vmem:[%s446 + $0x38] sm:$0xff]
          %v2729 = vld [vmem:[%s446 + $0x40] sm:$0xff]
          %v2730 = vld [vmem:[%s446 + $0x48] sm:$0xff]
          %v2731 = vld [vmem:[%s446 + $0x50] sm:$0xff]
          %v2732 = vld [vmem:[%s446 + $0x58] sm:$0xff]
          %v2733 = vld [vmem:[%s446 + $0x60] sm:$0xff]
          %v2734 = vld [vmem:[%s446 + $0x68] sm:$0xff]
          %v2735 = vld [vmem:[%s446 + $0x70] sm:$0xff]
          %v2736 = vld [vmem:[%s446 + $0x78] sm:$0xff]
          %v2737 = vld [vmem:[%s6] sm:$0xff]
          %v2738 = vld [vmem:[%s6 + $0x8] sm:$0x1]
          %v2740 = vsel %vm621, %v2721, 0
          %v2743 = vsel %vm621, %v2722, 0
          %v2746 = vsel %vm621, %v2723, 0
          %v2749 = vsel %vm621, %v2724, 0
          %v2752 = vsel %vm621, %v2725, 0
          %v2755 = vsel %vm621, %v2726, 0
          %v2758 = vsel %vm621, %v2727, 0
          %v2761 = vsel %vm621, %v2728, 0
          %v2764 = vsel %vm621, %v2729, 0
          %v2767 = vsel %vm621, %v2730, 0
          %v2770 = vsel %vm621, %v2731, 0
          %v2773 = vsel %vm621, %v2732, 0
          %v2776 = vsel %vm621, %v2733, 0
          %v2779 = vsel %vm621, %v2734, 0
          %v2782 = vsel %vm621, %v2735, 0
          %v2785 = vsel %vm621, %v2736, 0
          %vm2787 = vcmask 1040384
          %v2789 = vsel %vm2787, %v2738, 0
          %2791 = vmatpush.msra.mxu0 0.0
          %2792 = vmatpush.msra.mxu0 0.0
          %2793 = vmatpush.msra.mxu0 0.0
          %2794 = vmatpush.msra.mxu0 0.0
          %2795 = vmatpush.msra.mxu0 0.0
          %2796 = vmatpush.msra.mxu0 0.0
          %2797 = vmatpush.msra.mxu0 0.0
          %2798 = vmatpush.msra.mxu0 0.0
          %2799 = vmatpush.msra.mxu0 0.0
          %2800 = vmatpush.msra.mxu0 0.0
          %2801 = vmatpush.msra.mxu0 0.0
          %2802 = vmatpush.msra.mxu0 0.0
          %2803 = vmatpush.msra.mxu0 0.0
          %2804 = vmatpush.msra.mxu0 0.0
          %2805 = vmatpush.msra.mxu0 %v2789
          %2806 = vmatpush.msra.mxu0 %v2737
          %2807 = vmatmul.f32.gmra.mxu0 %v2740
          %v2808 = vpop.f32.mrf.mxu0
          %v2809 = vadd.f32 0.0, %v2808
          %2810 = vmatmul.f32.gmra.mxu0 %v2743
          %v2811 = vpop.f32.mrf.mxu0
          %v2812 = vadd.f32 0.0, %v2811
          %2813 = vmatmul.f32.gmra.mxu0 %v2746
          %v2814 = vpop.f32.mrf.mxu0
          %v2815 = vadd.f32 0.0, %v2814
          %2816 = vmatmul.f32.gmra.mxu0 %v2749
          %v2817 = vpop.f32.mrf.mxu0
          %v2818 = vadd.f32 0.0, %v2817
          %2819 = vmatmul.f32.gmra.mxu0 %v2752
          %v2820 = vpop.f32.mrf.mxu0
          %v2821 = vadd.f32 0.0, %v2820
          %2822 = vmatmul.f32.gmra.mxu0 %v2755
          %v2823 = vpop.f32.mrf.mxu0
          %v2824 = vadd.f32 0.0, %v2823
          %2825 = vmatmul.f32.gmra.mxu0 %v2758
          %v2826 = vpop.f32.mrf.mxu0
          %v2827 = vadd.f32 0.0, %v2826
          %2828 = vmatmul.f32.gmra.mxu0 %v2761
          %v2829 = vpop.f32.mrf.mxu0
          %v2830 = vadd.f32 0.0, %v2829
          %2831 = vmatmul.f32.gmra.mxu0 %v2764
          %v2832 = vpop.f32.mrf.mxu0
          %v2833 = vadd.f32 0.0, %v2832
          %2834 = vmatmul.f32.gmra.mxu0 %v2767
          %v2835 = vpop.f32.mrf.mxu0
          %v2836 = vadd.f32 0.0, %v2835
          %2837 = vmatmul.f32.gmra.mxu0 %v2770
          %v2838 = vpop.f32.mrf.mxu0
          %v2839 = vadd.f32 0.0, %v2838
          %2840 = vmatmul.f32.gmra.mxu0 %v2773
          %v2841 = vpop.f32.mrf.mxu0
          %v2842 = vadd.f32 0.0, %v2841
          %2843 = vmatmul.f32.gmra.mxu0 %v2776
          %v2844 = vpop.f32.mrf.mxu0
          %v2845 = vadd.f32 0.0, %v2844
          %2846 = vmatmul.f32.gmra.mxu0 %v2779
          %v2847 = vpop.f32.mrf.mxu0
          %v2848 = vadd.f32 0.0, %v2847
          %2849 = vmatmul.f32.gmra.mxu0 %v2782
          %v2850 = vpop.f32.mrf.mxu0
          %v2851 = vadd.f32 0.0, %v2850
          %2852 = vmatmul.f32.gmra.mxu0 %v2785
          %v2853 = vpop.f32.mrf.mxu0
          %v2854 = vadd.f32 0.0, %v2853
          %2855 = vdwg.mxu0
          %v2856 = vadd.f32 %v2674, %v2809
          %v2857 = vadd.f32 %v2677, %v2812
          %v2858 = vadd.f32 %v2680, %v2815
          %v2859 = vadd.f32 %v2683, %v2818
          %v2860 = vadd.f32 %v2686, %v2821
          %v2861 = vadd.f32 %v2689, %v2824
          %v2862 = vadd.f32 %v2692, %v2827
          %v2863 = vadd.f32 %v2695, %v2830
          %v2864 = vadd.f32 %v2698, %v2833
          %v2865 = vadd.f32 %v2701, %v2836
          %v2866 = vadd.f32 %v2704, %v2839
          %v2867 = vadd.f32 %v2707, %v2842
          %v2868 = vadd.f32 %v2710, %v2845
          %v2869 = vadd.f32 %v2713, %v2848
          %v2870 = vadd.f32 %v2716, %v2851
          %v2871 = vadd.f32 %v2719, %v2854
          %vm2872 = vcmask 31744
          %v2873 = vsel %vm2872, %v2856, -inf
          %2874 = vmax.xlane.f32.xlu0 %v2873
          %v2875 = vpop.xlane.xlu0 %2874
          %v2876 = vsel %vm2872, %v2857, -inf
          %2877 = vmax.xlane.f32.xlu0 %v2876
          %v2878 = vpop.xlane.xlu0 %2877
          %v2879 = vsel %vm2872, %v2858, -inf
          %2880 = vmax.xlane.f32.xlu0 %v2879
          %v2881 = vpop.xlane.xlu0 %2880
          %v2882 = vsel %vm2872, %v2859, -inf
          %2883 = vmax.xlane.f32.xlu0 %v2882
          %v2884 = vpop.xlane.xlu0 %2883
          %v2885 = vsel %vm2872, %v2860, -inf
          %2886 = vmax.xlane.f32.xlu0 %v2885
          %v2887 = vpop.xlane.xlu0 %2886
          %v2888 = vsel %vm2872, %v2861, -inf
          %2889 = vmax.xlane.f32.xlu0 %v2888
          %v2890 = vpop.xlane.xlu0 %2889
          %v2891 = vsel %vm2872, %v2862, -inf
          %2892 = vmax.xlane.f32.xlu0 %v2891
          %v2893 = vpop.xlane.xlu0 %2892
          %v2894 = vsel %vm2872, %v2863, -inf
          %2895 = vmax.xlane.f32.xlu0 %v2894
          %v2896 = vpop.xlane.xlu0 %2895
          %v2897 = vsel %vm2872, %v2864, -inf
          %2898 = vmax.xlane.f32.xlu0 %v2897
          %v2899 = vpop.xlane.xlu0 %2898
          %v2900 = vsel %vm2872, %v2865, -inf
          %2901 = vmax.xlane.f32.xlu0 %v2900
          %v2902 = vpop.xlane.xlu0 %2901
          %v2903 = vsel %vm2872, %v2866, -inf
          %2904 = vmax.xlane.f32.xlu0 %v2903
          %v2905 = vpop.xlane.xlu0 %2904
          %v2906 = vsel %vm2872, %v2867, -inf
          %2907 = vmax.xlane.f32.xlu0 %v2906
          %v2908 = vpop.xlane.xlu0 %2907
          %v2909 = vsel %vm2872, %v2868, -inf
          %2910 = vmax.xlane.f32.xlu0 %v2909
          %v2911 = vpop.xlane.xlu0 %2910
          %v2912 = vsel %vm2872, %v2869, -inf
          %2913 = vmax.xlane.f32.xlu0 %v2912
          %v2914 = vpop.xlane.xlu0 %2913
          %v2915 = vsel %vm2872, %v2870, -inf
          %2916 = vmax.xlane.f32.xlu0 %v2915
          %v2917 = vpop.xlane.xlu0 %2916
          %v2918 = vsel %vm2872, %v2871, -inf
          %2919 = vmax.xlane.f32.xlu0 %v2918
          %v2920 = vpop.xlane.xlu0 %2919
          %v2921 = vsub.f32 %v2856, %v2875
          %v2922 = vsub.f32 %v2857, %v2878
          %v2923 = vsub.f32 %v2858, %v2881
          %v2924 = vsub.f32 %v2859, %v2884
          %v2925 = vsub.f32 %v2860, %v2887
          %v2926 = vsub.f32 %v2861, %v2890
          %v2927 = vsub.f32 %v2862, %v2893
          %v2928 = vsub.f32 %v2863, %v2896
          %v2929 = vsub.f32 %v2864, %v2899
          %v2930 = vsub.f32 %v2865, %v2902
          %v2931 = vsub.f32 %v2866, %v2905
          %v2932 = vsub.f32 %v2867, %v2908
          %v2933 = vsub.f32 %v2868, %v2911
          %v2934 = vsub.f32 %v2869, %v2914
          %v2935 = vsub.f32 %v2870, %v2917
          %v2936 = vsub.f32 %v2871, %v2920
          %v2937 = vmul.f32 %v2921, 1.442695
          %v2938 = vpow.pop %v2937
          %v2939 = vmul.f32 %v2922, 1.442695
          %v2940 = vpow.pop %v2939
          %v2941 = vmul.f32 %v2923, 1.442695
          %v2942 = vpow.pop %v2941
          %v2943 = vmul.f32 %v2924, 1.442695
          %v2944 = vpow.pop %v2943
          %v2945 = vmul.f32 %v2925, 1.442695
          %v2946 = vpow.pop %v2945
          %v2947 = vmul.f32 %v2926, 1.442695
          %v2948 = vpow.pop %v2947
          %v2949 = vmul.f32 %v2927, 1.442695
          %v2950 = vpow.pop %v2949
          %v2951 = vmul.f32 %v2928, 1.442695
          %v2952 = vpow.pop %v2951
          %v2953 = vmul.f32 %v2929, 1.442695
          %v2954 = vpow.pop %v2953
          %v2955 = vmul.f32 %v2930, 1.442695
          %v2956 = vpow.pop %v2955
          %v2957 = vmul.f32 %v2931, 1.442695
          %v2958 = vpow.pop %v2957
          %v2959 = vmul.f32 %v2932, 1.442695
          %v2960 = vpow.pop %v2959
          %v2961 = vmul.f32 %v2933, 1.442695
          %v2962 = vpow.pop %v2961
          %v2963 = vmul.f32 %v2934, 1.442695
          %v2964 = vpow.pop %v2963
          %v2965 = vmul.f32 %v2935, 1.442695
          %v2966 = vpow.pop %v2965
          %v2967 = vmul.f32 %v2936, 1.442695
          %v2968 = vpow.pop %v2967
          %v2969 = vsel %vm2872, %v2938, 0.0
          %2970 = vadd.xlane.f32.xlu0 %v2969
          %v2971 = vpop.xlane.xlu0 %2970
          %v2972 = vsel %vm2872, %v2940, 0.0
          %2973 = vadd.xlane.f32.xlu0 %v2972
          %v2974 = vpop.xlane.xlu0 %2973
          %v2975 = vsel %vm2872, %v2942, 0.0
          %2976 = vadd.xlane.f32.xlu0 %v2975
          %v2977 = vpop.xlane.xlu0 %2976
          %v2978 = vsel %vm2872, %v2944, 0.0
          %2979 = vadd.xlane.f32.xlu0 %v2978
          %v2980 = vpop.xlane.xlu0 %2979
          %v2981 = vsel %vm2872, %v2946, 0.0
          %2982 = vadd.xlane.f32.xlu0 %v2981
          %v2983 = vpop.xlane.xlu0 %2982
          %v2984 = vsel %vm2872, %v2948, 0.0
          %2985 = vadd.xlane.f32.xlu0 %v2984
          %v2986 = vpop.xlane.xlu0 %2985
          %v2987 = vsel %vm2872, %v2950, 0.0
          %2988 = vadd.xlane.f32.xlu0 %v2987
          %v2989 = vpop.xlane.xlu0 %2988
          %v2990 = vsel %vm2872, %v2952, 0.0
          %2991 = vadd.xlane.f32.xlu0 %v2990
          %v2992 = vpop.xlane.xlu0 %2991
          %v2993 = vsel %vm2872, %v2954, 0.0
          %2994 = vadd.xlane.f32.xlu0 %v2993
          %v2995 = vpop.xlane.xlu0 %2994
          %v2996 = vsel %vm2872, %v2956, 0.0
          %2997 = vadd.xlane.f32.xlu0 %v2996
          %v2998 = vpop.xlane.xlu0 %2997
          %v2999 = vsel %vm2872, %v2958, 0.0
          %3000 = vadd.xlane.f32.xlu0 %v2999
          %v3001 = vpop.xlane.xlu0 %3000
          %v3002 = vsel %vm2872, %v2960, 0.0
          %3003 = vadd.xlane.f32.xlu0 %v3002
          %v3004 = vpop.xlane.xlu0 %3003
          %v3005 = vsel %vm2872, %v2962, 0.0
          %3006 = vadd.xlane.f32.xlu0 %v3005
          %v3007 = vpop.xlane.xlu0 %3006
          %v3008 = vsel %vm2872, %v2964, 0.0
          %3009 = vadd.xlane.f32.xlu0 %v3008
          %v3010 = vpop.xlane.xlu0 %3009
          %v3011 = vsel %vm2872, %v2966, 0.0
          %3012 = vadd.xlane.f32.xlu0 %v3011
          %v3013 = vpop.xlane.xlu0 %3012
          %v3014 = vsel %vm2872, %v2968, 0.0
          %3015 = vadd.xlane.f32.xlu0 %v3014
          %v3016 = vpop.xlane.xlu0 %3015
          %v3017 = vlog2.pop %v2971
          %v3018 = vmul.f32 %v3017, 0.6931472
          %v3019 = vlog2.pop %v2974
          %v3020 = vmul.f32 %v3019, 0.6931472
          %v3021 = vlog2.pop %v2977
          %v3022 = vmul.f32 %v3021, 0.6931472
          %v3023 = vlog2.pop %v2980
          %v3024 = vmul.f32 %v3023, 0.6931472
          %v3025 = vlog2.pop %v2983
          %v3026 = vmul.f32 %v3025, 0.6931472
          %v3027 = vlog2.pop %v2986
          %v3028 = vmul.f32 %v3027, 0.6931472
          %v3029 = vlog2.pop %v2989
          %v3030 = vmul.f32 %v3029, 0.6931472
          %v3031 = vlog2.pop %v2992
          %v3032 = vmul.f32 %v3031, 0.6931472
          %v3033 = vlog2.pop %v2995
          %v3034 = vmul.f32 %v3033, 0.6931472
          %v3035 = vlog2.pop %v2998
          %v3036 = vmul.f32 %v3035, 0.6931472
          %v3037 = vlog2.pop %v3001
          %v3038 = vmul.f32 %v3037, 0.6931472
          %v3039 = vlog2.pop %v3004
          %v3040 = vmul.f32 %v3039, 0.6931472
          %v3041 = vlog2.pop %v3007
          %v3042 = vmul.f32 %v3041, 0.6931472
          %v3043 = vlog2.pop %v3010
          %v3044 = vmul.f32 %v3043, 0.6931472
          %v3045 = vlog2.pop %v3013
          %v3046 = vmul.f32 %v3045, 0.6931472
          %v3047 = vlog2.pop %v3016
          %v3048 = vmul.f32 %v3047, 0.6931472
          %v3049 = vsub.f32 %v2921, %v3018
          %v3050 = vsub.f32 %v2922, %v3020
          %v3051 = vsub.f32 %v2923, %v3022
          %v3052 = vsub.f32 %v2924, %v3024
          %v3053 = vsub.f32 %v2925, %v3026
          %v3054 = vsub.f32 %v2926, %v3028
          %v3055 = vsub.f32 %v2927, %v3030
          %v3056 = vsub.f32 %v2928, %v3032
          %v3057 = vsub.f32 %v2929, %v3034
          %v3058 = vsub.f32 %v2930, %v3036
          %v3059 = vsub.f32 %v2931, %v3038
          %v3060 = vsub.f32 %v2932, %v3040
          %v3061 = vsub.f32 %v2933, %v3042
          %v3062 = vsub.f32 %v2934, %v3044
          %v3063 = vsub.f32 %v2935, %v3046
          %v3064 = vsub.f32 %v2936, %v3048
          %3065 = vst.msk [vmem:[%s452] sm:$0xff] %vm2872, %v3049
          %3066 = vst.msk [vmem:[%s452 + $0x8] sm:$0xff] %vm2872, %v3050
          %3067 = vst.msk [vmem:[%s452 + $0x10] sm:$0xff] %vm2872, %v3051
          %3068 = vst.msk [vmem:[%s452 + $0x18] sm:$0xff] %vm2872, %v3052
          %3069 = vst.msk [vmem:[%s452 + $0x20] sm:$0xff] %vm2872, %v3053
          %3070 = vst.msk [vmem:[%s452 + $0x28] sm:$0xff] %vm2872, %v3054
          %3071 = vst.msk [vmem:[%s452 + $0x30] sm:$0xff] %vm2872, %v3055
          %3072 = vst.msk [vmem:[%s452 + $0x38] sm:$0xff] %vm2872, %v3056
          %3073 = vst.msk [vmem:[%s452 + $0x40] sm:$0xff] %vm2872, %v3057
          %3074 = vst.msk [vmem:[%s452 + $0x48] sm:$0xff] %vm2872, %v3058
          %3075 = vst.msk [vmem:[%s452 + $0x50] sm:$0xff] %vm2872, %v3059
          %3076 = vst.msk [vmem:[%s452 + $0x58] sm:$0xff] %vm2872, %v3060
          %3077 = vst.msk [vmem:[%s452 + $0x60] sm:$0xff] %vm2872, %v3061
          %3078 = vst.msk [vmem:[%s452 + $0x68] sm:$0xff] %vm2872, %v3062
          %3079 = vst.msk [vmem:[%s452 + $0x70] sm:$0xff] %vm2872, %v3063
          %3080 = vst.msk [vmem:[%s452 + $0x78] sm:$0xff] %vm2872, %v3064
        $region94: #{tpu_custom_call.1} parent=81 // pred_fallthru
          _
        %s3081 = smul.u32 16, %s22
        %p3082 = scmp.lt.s32.totalorder %s3081, 31
        %s3083 = scalar_select %p3082, %s3081, 31
        %s3084 = smul.addr %s3083, 8
        %s3085 = scalar_lea.vmem %s7, %s3084
        // Predicated region
        $region95: #{tpu_custom_call.1} parent=81 // pred_check
          %p3086 = pneg %p217
        $region96: #{tpu_custom_call.1} parent=81 // pred_check_branch
          %3088 = sbr.rel (%p3086) target = $region98
        $region97: #{tpu_custom_call.1} parent=81 // pred_region
          %s3089 = smul.u32 16, %s22
        $region98: #{tpu_custom_call.1} parent=81 // pred_fallthru
          _
      $region82: #{tpu_custom_call.1} parent=5 // pred_fallthru
        _
      %p3090 = scmp.le.s32.totalorder 2, %s13
      // Predicated region
      $region99: #{tpu_custom_call.1} parent=5 // pred_check
        %p3091 = pneg %p3090
      $region100: #{tpu_custom_call.1} parent=5 // pred_check_branch
        %3093 = sbr.rel (%p3091) target = $region102
      $region101: #{tpu_custom_call.1} parent=5 // pred_region
        %s3094 = ssub.s32 %s13, 2
        // Predicated region
        $region103: #{tpu_custom_call.1} parent=101 // pred_check
          %p3095 = pneg %p223
        $region104: #{tpu_custom_call.1} parent=101 // pred_check_branch
          %3097 = sbr.rel (%p3095) target = $region106
        $region105: #{tpu_custom_call.1} parent=101 // pred_region
          %s3098 = smul.u32 16, %s24
          %p3099 = scmp.lt.s32.totalorder %s3098, 31
          %s3100 = scalar_select %p3099, %s3098, 31
          %s3101 = smul.addr %s3100, 8
          %s3102 = scalar_lea.vmem %s7, %s3101
        $region106: #{tpu_custom_call.1} parent=101 // pred_fallthru
          _
      $region102: #{tpu_custom_call.1} parent=5 // pred_fallthru
        _
    $region6: #{tpu_custom_call.1} parent=1 // loop_footer
      %s17 = sadd.s32 1, %s13
    $region7: #{tpu_custom_call.1} parent=1 // loop_footer_branch
      %12 = sbr.rel target = $region3
    $region8: #{tpu_custom_call.1} parent=1 // loop_exit
      _

</llo_original>
